<compile_context>
chip_gen: v7x
topology: tpu7x:2x2x1
jax: 0.10.0
libtpu: 0.0.40
codegen_flags: <defaults>
</compile_context>

<pallas_src>
import jax
import jax.numpy as jnp
from jax.experimental import pallas as pl
from jax.experimental.pallas import tpu as pltpu

# Set to jnp.bfloat16 on v6e/v7x for ~2x MXU throughput (f32 accumulation is
# kept via preferred_element_type); default f32 preserves reference numerics.
MATMUL_DTYPE = jnp.float32


def _leaky_relu(x, slope=0.01):
    # matches F.leaky_relu default negative_slope=0.01
    return jnp.where(x >= 0, x, slope * x)


def _sigmoid(x):
    # numerically stable sigmoid; exp -> EUP, approx reciprocal -> EUP,
    # so the whole epilogue overlaps with MXU work.
    ex = jnp.exp(-jnp.abs(x))
    inv = pl.reciprocal(1.0 + ex, approx=True)
    return jnp.where(x >= 0, inv, ex * inv)


def _round_up(n, m):
    return pl.cdiv(n, m) * m


# ---------------------------------------------------------------------------
# Kernel 1: per-edge MLP  score = sigmoid(MLP(x[src] - x[dst]))
#   diff = G @ x  (G is the +/-1 src/dst incidence matrix -> fused gather)
#   MLP: 256 -> 256 -> 128 -> 64 -> 1 with leaky_relu between layers.
# Output is a lane-dense (tile_e, 128) slab; wrapper slices column 0.
# ---------------------------------------------------------------------------
def edge_mlp_kernel(g_ref, x_ref, w1_ref, b1_ref, w2_ref, b2_ref,
                    w3_ref, b3_ref, w4_ref, b4_ref, out_ref):
    diff = jnp.dot(g_ref[...].astype(MATMUL_DTYPE),
                   x_ref[...].astype(MATMUL_DTYPE),
                   preferred_element_type=jnp.float32)
    h = _leaky_relu(jnp.dot(diff.astype(MATMUL_DTYPE), w1_ref[...].astype(MATMUL_DTYPE),
                            preferred_element_type=jnp.float32) + b1_ref[...])
    h = _leaky_relu(jnp.dot(h.astype(MATMUL_DTYPE), w2_ref[...].astype(MATMUL_DTYPE),
                            preferred_element_type=jnp.float32) + b2_ref[...])
    h = _leaky_relu(jnp.dot(h.astype(MATMUL_DTYPE), w3_ref[...].astype(MATMUL_DTYPE),
                            preferred_element_type=jnp.float32) + b3_ref[...])
    # final 64 -> 1 layer as a VPU/XLU reduction (no 1-column MXU matmul)
    s = jnp.sum(h * w4_ref[...], axis=-1, keepdims=True) + b4_ref[...]
    sig = _sigmoid(s)
    # lane-dense store: broadcast the score across 128 lanes (unmasked vst)
    out_ref[...] = jnp.broadcast_to(sig, out_ref.shape)


def edge_mlp(g, x, params, *, tile_e=128):
    E_pad, N_pad = g.shape
    _, C = x.shape
    (w1, b1), (w2, b2), (w3, b3), (w4, b4) = params
    w4_row = w4.reshape(1, w4.shape[0])      # (64, 1) -> (1, 64) for VPU reduce

    def full_spec(shape):
        return pl.BlockSpec(shape, lambda i: (0, 0))

    cost = pl.CostEstimate(
        flops=2 * E_pad * (N_pad * C
                           + w1.shape[0] * w1.shape[1]
                           + w2.shape[0] * w2.shape[1]
                           + w3.shape[0] * w3.shape[1]
                           + w4.shape[0] * w4.shape[1]),
        transcendentals=2 * E_pad,
        bytes_accessed=4 * (E_pad * N_pad + N_pad * C
                            + w1.size + w2.size + w3.size + w4.size
                            + b1.size + b2.size + b3.size + b4.size
                            + E_pad * 128),
    )

    return pl.pallas_call(
        edge_mlp_kernel,
        out_shape=jax.ShapeDtypeStruct((E_pad, 128), jnp.float32),
        grid_spec=pl.GridSpec(
            grid=(E_pad // tile_e,),
            in_specs=[pl.BlockSpec((tile_e, N_pad), lambda i: (i, 0)),  # G rows
                      full_spec((N_pad, C)),                            # x (resident)
                      full_spec(w1.shape), full_spec(b1.shape),
                      full_spec(w2.shape), full_spec(b2.shape),
                      full_spec(w3.shape), full_spec(b3.shape),
                      full_spec(w4_row.shape), full_spec(b4.shape)],
            out_specs=pl.BlockSpec((tile_e, 128), lambda i: (i, 0)),
        ),
        compiler_params=pltpu.CompilerParams(
            dimension_semantics=("parallel",)),
        cost_estimate=cost,
    )(g, x, w1, b1, w2, b2, w3, b3, w4_row, b4)


# ---------------------------------------------------------------------------
# Kernel 2: SAGEConv('mean', edge_weight) + leaky_relu + L2 row-normalize
#   neigh = Adj_norm @ x            (weighted mean over in-edges, K-tiled)
#   h     = x @ W_self + neigh @ W_neigh + bias
#   A     = normalize(leaky_relu(h), dim=1)
# ---------------------------------------------------------------------------
def sage_kernel(x_k_ref, x_self_ref, adj_ref, ws_ref, wn_ref, b_ref,
                out_ref, acc_ref):
    k = pl.program_id(1)

    @pl.when(k == 0)
    def _():
        acc_ref[...] = jnp.zeros_like(acc_ref)

    acc_ref[...] += jnp.dot(adj_ref[...].astype(MATMUL_DTYPE),
                            x_k_ref[...].astype(MATMUL_DTYPE),
                            preferred_element_type=jnp.float32)

    @pl.when(k == pl.num_programs(1) - 1)
    def _():
        h = (jnp.dot(x_self_ref[...].astype(MATMUL_DTYPE),
                     ws_ref[...].astype(MATMUL_DTYPE),
                     preferred_element_type=jnp.float32)
             + jnp.dot(acc_ref[...].astype(MATMUL_DTYPE),
                       wn_ref[...].astype(MATMUL_DTYPE),
                       preferred_element_type=jnp.float32)
             + b_ref[...])
        h = _leaky_relu(h)
        # F.normalize(A, dim=1) == A / max(||A||_2, 1e-12)
        # -> clamp the squared norm at 1e-24 and use one rsqrt (EUP).
        ss = jnp.sum(h * h, axis=1, keepdims=True)
        out_ref[...] = (h * jax.lax.rsqrt(jnp.maximum(ss, 1e-24))).astype(out_ref.dtype)


def sage_conv(x, adj_norm, w_self, w_neigh, bias, *, tile_n=128, tile_k=128):
    N_pad, C = x.shape
    out_f = w_self.shape[1]

    def full_spec(shape):
        return pl.BlockSpec(shape, lambda i, k: (0, 0))

    cost = pl.CostEstimate(
        flops=2 * N_pad * (N_pad * C + 2 * C * out_f),
        transcendentals=N_pad,
        bytes_accessed=4 * (N_pad * N_pad + 2 * N_pad * C
                            + 2 * C * out_f + out_f + N_pad * out_f),
    )

    return pl.pallas_call(
        sage_kernel,
        out_shape=jax.ShapeDtypeStruct((N_pad, out_f), jnp.float32),
        grid_spec=pltpu.PrefetchScalarGridSpec(
            num_scalar_prefetch=0,
            grid=(N_pad // tile_n, N_pad // tile_k),
            in_specs=[pl.BlockSpec((tile_k, C), lambda i, k: (k, 0)),   # x K-block
                      pl.BlockSpec((tile_n, C), lambda i, k: (i, 0)),   # x self rows
                      pl.BlockSpec((tile_n, tile_k), lambda i, k: (i, k)),  # Adj tile
                      full_spec(w_self.shape),
                      full_spec(w_neigh.shape),
                      full_spec(bias.shape)],
            out_specs=pl.BlockSpec((tile_n, out_f), lambda i, k: (i, 0)),
            scratch_shapes=[pltpu.VMEM((tile_n, C), jnp.float32)],
        ),
        compiler_params=pltpu.CompilerParams(
            dimension_semantics=("parallel", "arbitrary")),
        cost_estimate=cost,
    )(x, x, adj_norm, w_self, w_neigh, bias)


# ---------------------------------------------------------------------------
# Parameter init (deterministic, PyTorch-Linear-style uniform)
# ---------------------------------------------------------------------------
def linear_params(key, in_f, out_f, with_bias=True):
    kw, kb = jax.random.split(key)
    bound = 1.0 / jnp.sqrt(jnp.float32(in_f))
    w = jax.random.uniform(kw, (in_f, out_f), jnp.float32, -bound, bound)
    if with_bias:
        b = jax.random.uniform(kb, (1, out_f), jnp.float32, -bound, bound)
        return w, b
    return w


def my_gnn_forward(x, src, dst, mlp_params, w_self, w_neigh, sage_bias,
                   *, tile_e=128, tile_n=128):
    N, C = x.shape
    E = src.shape[0]
    E_pad = _round_up(E, tile_e)
    N_pad = _round_up(N, tile_n)

    x_pad = jnp.pad(x, ((0, N_pad - N), (0, 0)))

    # ---- fused edge gather: diff = (onehot(src) - onehot(dst)) @ x, done on
    # the MXU inside the edge kernel (no E x 256 diff tensor through HBM).
    rows = jnp.arange(E)
    g = jnp.zeros((E_pad, N_pad), jnp.float32)
    g = g.at[rows, src].add(1.0).at[rows, dst].add(-1.0)

    scores = edge_mlp(g, x_pad, mlp_params, tile_e=tile_e)   # (E_pad, 128) slab
    e = scores[:E, :1]                                       # (E, 1)

    # ---- weighted mean aggregation as dense normalized adjacency (glue) ----
    # TODO(synk): for realistic graph sizes replace the dense N x N adjacency
    # (and this scatter-add glue) with a CSR / scalar-prefetch segment-sum
    # formulation inside the kernel.
    adj = jnp.zeros((N_pad, N_pad), jnp.float32).at[dst, src].add(e[:, 0])
    deg = jnp.zeros((N_pad,), jnp.float32).at[dst].add(1.0)
    adj_norm = adj / jnp.maximum(deg, 1.0)[:, None]           # DGL mean: /= in-degree

    A = sage_conv(x_pad, adj_norm, w_self, w_neigh, sage_bias,
                  tile_n=tile_n, tile_k=tile_n)
    return A[:N], e


if __name__ == "__main__":
    N = 16          # nodes
    E = 32          # edges
    C = 256         # in_feats (MLP requires 256-dim node features)
    OUT = 256       # SAGEConv output feats

    key = jax.random.PRNGKey(0)
    (k_x, k_src, k_dst,
     k_m1, k_m2, k_m3, k_m4, k_ws, k_wn) = jax.random.split(key, 9)

    x = jax.random.normal(k_x, (N, C), jnp.float32)
    src = jax.random.randint(k_src, (E,), 0, N)
    dst = jax.random.randint(k_dst, (E,), 0, N)

    # MLP(256,1): Linear(256,256) -> Linear(256,128) -> Linear(128,64) -> Linear(64,1)
    mlp_params = (
        linear_params(k_m1, 256, 256),
        linear_params(k_m2, 256, 128),
        linear_params(k_m3, 128, 64),
        linear_params(k_m4, 64, 1),
    )
    # SAGEConv(256, 256, 'mean'): fc_self / fc_neigh (no bias) + zero bias param
    w_self = linear_params(k_ws, C, OUT, with_bias=False)
    w_neigh = linear_params(k_wn, C, OUT, with_bias=False)
    sage_bias = jnp.zeros((1, OUT), jnp.float32)

    A, e = my_gnn_forward(x, src, dst, mlp_params, w_self, w_neigh, sage_bias)
    jax.block_until_ready((A, e))
    assert A.shape == (N, OUT) and e.shape == (E, 1)
    assert bool(jnp.all(jnp.isfinite(A))) and bool(jnp.all((e >= 0) & (e <= 1)))
    print("KERNEL_OK")
</pallas_src>

<mosaic_0001>
module attributes {stable_mosaic.version = 11 : i64} {
  func.func @edge_mlp_kernel(%arg0: i32, %arg1: memref<128x128xf32, #tpu.memory_space<vmem>>, %arg2: memref<128x256xf32, #tpu.memory_space<vmem>>, %arg3: memref<256x256xf32, #tpu.memory_space<vmem>>, %arg4: memref<1x256xf32, #tpu.memory_space<vmem>>, %arg5: memref<256x128xf32, #tpu.memory_space<vmem>>, %arg6: memref<1x128xf32, #tpu.memory_space<vmem>>, %arg7: memref<128x64xf32, #tpu.memory_space<vmem>>, %arg8: memref<1x64xf32, #tpu.memory_space<vmem>>, %arg9: memref<1x64xf32, #tpu.memory_space<vmem>>, %arg10: memref<1x1xf32, #tpu.memory_space<vmem>>, %arg11: memref<128x128xf32, #tpu.memory_space<vmem>>) attributes {dimension_semantics = [#tpu.dimension_semantics<parallel>], iteration_bounds = array<i64: 1>, scalar_prefetch = 0 : i64, scratch_operands = 0 : i64, tpu.core_type = #tpu.core_type<tc>, window_params = [{transform_indices = @transform_0, window_bounds = array<i64: 128, 128>}, {pipeline_mode = #tpu.pipeline_mode<synchronous>, transform_indices = @transform_1, window_bounds = array<i64: 128, 256>}, {pipeline_mode = #tpu.pipeline_mode<synchronous>, transform_indices = @transform_2, window_bounds = array<i64: 256, 256>}, {pipeline_mode = #tpu.pipeline_mode<synchronous>, transform_indices = @transform_3, window_bounds = array<i64: 1, 256>}, {pipeline_mode = #tpu.pipeline_mode<synchronous>, transform_indices = @transform_4, window_bounds = array<i64: 256, 128>}, {pipeline_mode = #tpu.pipeline_mode<synchronous>, transform_indices = @transform_5, window_bounds = array<i64: 1, 128>}, {pipeline_mode = #tpu.pipeline_mode<synchronous>, transform_indices = @transform_6, window_bounds = array<i64: 128, 64>}, {pipeline_mode = #tpu.pipeline_mode<synchronous>, transform_indices = @transform_7, window_bounds = array<i64: 1, 64>}, {pipeline_mode = #tpu.pipeline_mode<synchronous>, transform_indices = @transform_8, window_bounds = array<i64: 1, 64>}, {pipeline_mode = #tpu.pipeline_mode<synchronous>, transform_indices = @transform_9, window_bounds = array<i64: 1, 1>}, {transform_indices = @transform_10, window_bounds = array<i64: 128, 128>}]} {
    %c0 = arith.constant 0 : index
    %c0_0 = arith.constant 0 : index
    %0 = vector.load %arg1[%c0, %c0_0] : memref<128x128xf32, #tpu.memory_space<vmem>>, vector<128x128xf32>
    %c0_1 = arith.constant 0 : index
    %c0_2 = arith.constant 0 : index
    %1 = vector.load %arg2[%c0_1, %c0_2] : memref<128x256xf32, #tpu.memory_space<vmem>>, vector<128x256xf32>
    %cst = arith.constant dense<0.000000e+00> : vector<128x256xf32>
    %2 = tpu.matmul %0, %1, %cst {dimension_numbers = #tpu.dot_dimension_numbers<[1], [0], [0], [1], [0, 0, 1, 1], [], []>} : vector<128x128xf32>, vector<128x256xf32>, vector<128x256xf32> -> vector<128x256xf32>
    %c0_3 = arith.constant 0 : index
    %c0_4 = arith.constant 0 : index
    %3 = vector.load %arg3[%c0_3, %c0_4] : memref<256x256xf32, #tpu.memory_space<vmem>>, vector<256x256xf32>
    %cst_5 = arith.constant dense<0.000000e+00> : vector<128x256xf32>
    %4 = tpu.matmul %2, %3, %cst_5 {dimension_numbers = #tpu.dot_dimension_numbers<[1], [0], [0], [1], [0, 0, 1, 1], [], []>} : vector<128x256xf32>, vector<256x256xf32>, vector<128x256xf32> -> vector<128x256xf32>
    %c0_6 = arith.constant 0 : index
    %c0_7 = arith.constant 0 : index
    %5 = vector.load %arg4[%c0_6, %c0_7] : memref<1x256xf32, #tpu.memory_space<vmem>>, vector<1x256xf32>
    %6 = vector.broadcast %5 : vector<1x256xf32> to vector<128x256xf32>
    %7 = arith.addf %4, %6 : vector<128x256xf32>
    %cst_8 = arith.constant 0.000000e+00 : f32
    %8 = vector.broadcast %cst_8 : f32 to vector<128x256xf32>
    %9 = arith.cmpf oge, %7, %8 : vector<128x256xf32>
    %cst_9 = arith.constant 0.00999999977 : f32
    %10 = vector.broadcast %cst_9 : f32 to vector<128x256xf32>
    %11 = arith.mulf %10, %7 : vector<128x256xf32>
    %12 = arith.select %9, %7, %11 : vector<128x256xi1>, vector<128x256xf32>
    %c0_10 = arith.constant 0 : index
    %c0_11 = arith.constant 0 : index
    %13 = vector.load %arg5[%c0_10, %c0_11] : memref<256x128xf32, #tpu.memory_space<vmem>>, vector<256x128xf32>
    %cst_12 = arith.constant dense<0.000000e+00> : vector<128x128xf32>
    %14 = tpu.matmul %12, %13, %cst_12 {dimension_numbers = #tpu.dot_dimension_numbers<[1], [0], [0], [1], [0, 0, 1, 1], [], []>} : vector<128x256xf32>, vector<256x128xf32>, vector<128x128xf32> -> vector<128x128xf32>
    %c0_13 = arith.constant 0 : index
    %c0_14 = arith.constant 0 : index
    %15 = vector.load %arg6[%c0_13, %c0_14] : memref<1x128xf32, #tpu.memory_space<vmem>>, vector<1x128xf32>
    %16 = vector.broadcast %15 : vector<1x128xf32> to vector<128x128xf32>
    %17 = arith.addf %14, %16 : vector<128x128xf32>
    %cst_15 = arith.constant 0.000000e+00 : f32
    %18 = vector.broadcast %cst_15 : f32 to vector<128x128xf32>
    %19 = arith.cmpf oge, %17, %18 : vector<128x128xf32>
    %cst_16 = arith.constant 0.00999999977 : f32
    %20 = vector.broadcast %cst_16 : f32 to vector<128x128xf32>
    %21 = arith.mulf %20, %17 : vector<128x128xf32>
    %22 = arith.select %19, %17, %21 : vector<128x128xi1>, vector<128x128xf32>
    %c0_17 = arith.constant 0 : index
    %c0_18 = arith.constant 0 : index
    %23 = vector.load %arg7[%c0_17, %c0_18] : memref<128x64xf32, #tpu.memory_space<vmem>>, vector<128x64xf32>
    %cst_19 = arith.constant dense<0.000000e+00> : vector<128x64xf32>
    %24 = tpu.matmul %22, %23, %cst_19 {dimension_numbers = #tpu.dot_dimension_numbers<[1], [0], [0], [1], [0, 0, 1, 1], [], []>} : vector<128x128xf32>, vector<128x64xf32>, vector<128x64xf32> -> vector<128x64xf32>
    %c0_20 = arith.constant 0 : index
    %c0_21 = arith.constant 0 : index
    %25 = vector.load %arg8[%c0_20, %c0_21] : memref<1x64xf32, #tpu.memory_space<vmem>>, vector<1x64xf32>
    %26 = vector.broadcast %25 : vector<1x64xf32> to vector<128x64xf32>
    %27 = arith.addf %24, %26 : vector<128x64xf32>
    %cst_22 = arith.constant 0.000000e+00 : f32
    %28 = vector.broadcast %cst_22 : f32 to vector<128x64xf32>
    %29 = arith.cmpf oge, %27, %28 : vector<128x64xf32>
    %cst_23 = arith.constant 0.00999999977 : f32
    %30 = vector.broadcast %cst_23 : f32 to vector<128x64xf32>
    %31 = arith.mulf %30, %27 : vector<128x64xf32>
    %32 = arith.select %29, %27, %31 : vector<128x64xi1>, vector<128x64xf32>
    %c0_24 = arith.constant 0 : index
    %c0_25 = arith.constant 0 : index
    %33 = vector.load %arg9[%c0_24, %c0_25] : memref<1x64xf32, #tpu.memory_space<vmem>>, vector<1x64xf32>
    %34 = vector.broadcast %33 : vector<1x64xf32> to vector<128x64xf32>
    %35 = arith.mulf %32, %34 : vector<128x64xf32>
    %cst_26 = arith.constant dense<0.000000e+00> : vector<128xf32>
    %36 = vector.multi_reduction <add>, %35, %cst_26 [1] : vector<128x64xf32> to vector<128xf32>
    %37 = vector.shape_cast %36 : vector<128xf32> to vector<128x1xf32>
    %c0_27 = arith.constant 0 : index
    %c0_28 = arith.constant 0 : index
    %38 = vector.load %arg10[%c0_27, %c0_28] : memref<1x1xf32, #tpu.memory_space<vmem>>, vector<1x1xf32>
    %39 = vector.broadcast %38 : vector<1x1xf32> to vector<128x1xf32>
    %40 = arith.addf %37, %39 : vector<128x1xf32>
    %41 = math.absf %40 : vector<128x1xf32>
    %cst_29 = arith.constant 0.000000e+00 : f32
    %42 = vector.broadcast %cst_29 : f32 to vector<128x1xf32>
    %43 = arith.subf %42, %41 : vector<128x1xf32>
    %44 = math.exp %43 : vector<128x1xf32>
    %cst_30 = arith.constant 1.000000e+00 : f32
    %45 = vector.broadcast %cst_30 : f32 to vector<128x1xf32>
    %46 = arith.addf %45, %44 : vector<128x1xf32>
    %47 = tpu.reciprocal %46 {approx = true} : vector<128x1xf32> -> vector<128x1xf32>
    %cst_31 = arith.constant 0.000000e+00 : f32
    %48 = vector.broadcast %cst_31 : f32 to vector<128x1xf32>
    %49 = arith.cmpf oge, %40, %48 : vector<128x1xf32>
    %50 = arith.mulf %44, %47 : vector<128x1xf32>
    %51 = arith.select %49, %47, %50 : vector<128x1xi1>, vector<128x1xf32>
    %52 = vector.shape_cast %51 : vector<128x1xf32> to vector<128x1xf32>
    %53 = vector.broadcast %52 : vector<128x1xf32> to vector<128x128xf32>
    %c0_32 = arith.constant 0 : index
    %c0_33 = arith.constant 0 : index
    %54 = vector.load %arg11[%c0_32, %c0_33] : memref<128x128xf32, #tpu.memory_space<vmem>>, vector<128x128xf32>
    tpu.vector_store %arg11[%c0_32, %c0_33], %53 {strides = array<i32>} : memref<128x128xf32, #tpu.memory_space<vmem>>, vector<128x128xf32>,
    return
  }
  func.func @transform_0(%arg0: i32) -> (i32, i32) {
    %c0_i32 = arith.constant 0 : i32
    %c0_i32_0 = arith.constant 0 : i32
    return %arg0, %c0_i32 : i32, i32
  }
  func.func @transform_1(%arg0: i32) -> (i32, i32) {
    %c0_i32 = arith.constant 0 : i32
    %c0_i32_0 = arith.constant 0 : i32
    %c0_i32_1 = arith.constant 0 : i32
    return %c0_i32, %c0_i32_0 : i32, i32
  }
  func.func @transform_2(%arg0: i32) -> (i32, i32) {
    %c0_i32 = arith.constant 0 : i32
    %c0_i32_0 = arith.constant 0 : i32
    %c0_i32_1 = arith.constant 0 : i32
    return %c0_i32, %c0_i32_0 : i32, i32
  }
  func.func @transform_3(%arg0: i32) -> (i32, i32) {
    %c0_i32 = arith.constant 0 : i32
    %c0_i32_0 = arith.constant 0 : i32
    %c0_i32_1 = arith.constant 0 : i32
    return %c0_i32, %c0_i32_0 : i32, i32
  }
  func.func @transform_4(%arg0: i32) -> (i32, i32) {
    %c0_i32 = arith.constant 0 : i32
    %c0_i32_0 = arith.constant 0 : i32
    %c0_i32_1 = arith.constant 0 : i32
    return %c0_i32, %c0_i32_0 : i32, i32
  }
  func.func @transform_5(%arg0: i32) -> (i32, i32) {
    %c0_i32 = arith.constant 0 : i32
    %c0_i32_0 = arith.constant 0 : i32
    %c0_i32_1 = arith.constant 0 : i32
    return %c0_i32, %c0_i32_0 : i32, i32
  }
  func.func @transform_6(%arg0: i32) -> (i32, i32) {
    %c0_i32 = arith.constant 0 : i32
    %c0_i32_0 = arith.constant 0 : i32
    %c0_i32_1 = arith.constant 0 : i32
    return %c0_i32, %c0_i32_0 : i32, i32
  }
  func.func @transform_7(%arg0: i32) -> (i32, i32) {
    %c0_i32 = arith.constant 0 : i32
    %c0_i32_0 = arith.constant 0 : i32
    %c0_i32_1 = arith.constant 0 : i32
    return %c0_i32, %c0_i32_0 : i32, i32
  }
  func.func @transform_8(%arg0: i32) -> (i32, i32) {
    %c0_i32 = arith.constant 0 : i32
    %c0_i32_0 = arith.constant 0 : i32
    %c0_i32_1 = arith.constant 0 : i32
    return %c0_i32, %c0_i32_0 : i32, i32
  }
  func.func @transform_9(%arg0: i32) -> (i32, i32) {
    %c0_i32 = arith.constant 0 : i32
    %c0_i32_0 = arith.constant 0 : i32
    %c0_i32_1 = arith.constant 0 : i32
    return %c0_i32, %c0_i32_0 : i32, i32
  }
  func.func @transform_10(%arg0: i32) -> (i32, i32) {
    %c0_i32 = arith.constant 0 : i32
    %c0_i32_0 = arith.constant 0 : i32
    return %arg0, %c0_i32 : i32, i32
  }
}

</mosaic_0001>

<llo_original>
// kernel: tpu_custom_call.1
$region0: #{tpu_custom_call.1}
  #allocation0 [shape = 'u32[]', space=smem, size = 0x4, offset = 0x4, fixed_abs, tag = 'smem constant byte address 0x4 - core index']
  #allocation1 [shape = 'u32[144,128]{1,0:T(1,128)}', space=vmem, size = 0x12000, scoped, tag = 'internal scratch']
  #allocation2 [shape = 'f32[1,1]{1,0:T(1,128)S(1)}', space=vmem, size = 0x200, scoped, tag = 'scoped memory for tpu_custom_call.1']
  %s0 = inlined_call_operand.vmem [shape: f32[128,128], index: 0, kind: input, shape index: {}]
  %s1 = inlined_call_operand.hbm [shape: f32[128,256], index: 1, kind: input, shape index: {}]
  %s2 = inlined_call_operand.hbm [shape: f32[256,256], index: 2, kind: input, shape index: {}]
  %s3 = inlined_call_operand.vmem [shape: f32[1,256], index: 3, kind: input, shape index: {}]
  %s4 = inlined_call_operand.hbm [shape: f32[256,128], index: 4, kind: input, shape index: {}]
  %s5 = inlined_call_operand.vmem [shape: f32[1,128], index: 5, kind: input, shape index: {}]
  %s6 = inlined_call_operand.vmem [shape: f32[128,64], index: 6, kind: input, shape index: {}]
  %s7 = inlined_call_operand.vmem [shape: f32[1,64], index: 7, kind: input, shape index: {}]
  %s8 = inlined_call_operand.vmem [shape: f32[1,64], index: 8, kind: input, shape index: {}]
  %s9 = inlined_call_operand.<no memory space> [shape: f32[1,1], index: 9, kind: input, shape index: {}]
  %s10 = inlined_call_operand.hbm [shape: f32[128,128], index: 10, kind: output, shape index: {}]
  %s11 = sld [smem:[#allocation0]]
  $region62: #{tpu_custom_call.1} parent=0
    _
  %s13 = ssub.s32 1, %s11
  %s14 = scalar_select 0, %s13, %s11
  %v15 = vstv %s9
  %16 = vst [vmem:[#allocation2] sm:$0x1] %v15
  $region1: #{tpu_custom_call.1} parent=0
    #allocation3 [shape = 'u8[131072]{0}', space=vmem, size = 0x20000, scoped, tag = 'input window, operand 1, single buffered']
    #allocation4 [shape = 's32[1]{0}', space=sflag, size = 0x4, scoped, tag = 'scoped memory for tpu_custom_call.1']
    #allocation5 [shape = 's32[1]{0}', space=sflag, size = 0x4, scoped, tag = 'scoped memory for tpu_custom_call.1']
    #allocation6 [shape = 'u8[262144]{0}', space=vmem, size = 0x40000, scoped, tag = 'input window, operand 2, single buffered']
    #allocation7 [shape = 's32[1]{0}', space=sflag, size = 0x4, scoped, tag = 'scoped memory for tpu_custom_call.1']
    #allocation8 [shape = 'u8[131072]{0}', space=vmem, size = 0x20000, scoped, tag = 'input window, operand 4, single buffered']
    #allocation9 [shape = 'u8[65536]{0}', space=vmem, size = 0x10000, scoped, tag = 'output window, operand 0, single buffered']
    %17 = vsyncpa [#allocation4], 0
    %18 = vsyncpa [#allocation7], 0
    %19 = vsyncpa [#allocation5], 0
    // Predicated region
    $region2: #{tpu_custom_call.1} parent=1 // pred_check
      _
    $region3: #{tpu_custom_call.1} parent=1 // pred_check_branch
      %21 = sbr.rel (0) target = $region5
    $region4: #{tpu_custom_call.1} parent=1 // pred_region
      _
    $region5: #{tpu_custom_call.1} parent=1 // pred_fallthru
      _
    // Predicated region
    $region6: #{tpu_custom_call.1} parent=1 // pred_check
      _
    $region7: #{tpu_custom_call.1} parent=1 // pred_check_branch
      %23 = sbr.rel (0) target = $region9
    $region8: #{tpu_custom_call.1} parent=1 // pred_region
      %s25 = ssub.s32 4096, 4096
      %26 = vsyncadd [#allocation4], %s25
      %s27 = sshll.u32 [#allocation3], 4
      %s28 = int_to_ptr.vmem [resolvable:$true] %s27
      %33 = dma.hbm_to_vmem [thread:$0]  %s1, 4096, %s28, [#allocation4], 256, 256, 16
    $region9: #{tpu_custom_call.1} parent=1 // pred_fallthru
      _
    // Predicated region
    $region10: #{tpu_custom_call.1} parent=1 // pred_check
      _
    $region11: #{tpu_custom_call.1} parent=1 // pred_check_branch
      %35 = sbr.rel (0) target = $region13
    $region12: #{tpu_custom_call.1} parent=1 // pred_region
      %s37 = ssub.s32 8192, 8192
      %38 = vsyncadd [#allocation7], %s37
      %s39 = sshll.u32 [#allocation6], 4
      %s40 = int_to_ptr.vmem [resolvable:$true] %s39
      %45 = dma.hbm_to_vmem [thread:$0]  %s2, 8192, %s40, [#allocation7], 256, 256, 16
    $region13: #{tpu_custom_call.1} parent=1 // pred_fallthru
      _
    // Predicated region
    $region14: #{tpu_custom_call.1} parent=1 // pred_check
      _
    $region15: #{tpu_custom_call.1} parent=1 // pred_check_branch
      %47 = sbr.rel (0) target = $region17
    $region16: #{tpu_custom_call.1} parent=1 // pred_region
      _
    $region17: #{tpu_custom_call.1} parent=1 // pred_fallthru
      _
    // Predicated region
    $region18: #{tpu_custom_call.1} parent=1 // pred_check
      _
    $region19: #{tpu_custom_call.1} parent=1 // pred_check_branch
      %49 = sbr.rel (0) target = $region21
    $region20: #{tpu_custom_call.1} parent=1 // pred_region
      %s51 = ssub.s32 4096, 4096
      %52 = vsyncadd [#allocation7], %s51
      %s53 = sshll.u32 [#allocation8], 4
      %s54 = int_to_ptr.vmem [resolvable:$true] %s53
      %59 = dma.hbm_to_vmem [thread:$0]  %s4, 4096, %s54, [#allocation7], 128, 128, 8
    $region21: #{tpu_custom_call.1} parent=1 // pred_fallthru
      _
    // Predicated region
    $region22: #{tpu_custom_call.1} parent=1 // pred_check
      _
    $region23: #{tpu_custom_call.1} parent=1 // pred_check_branch
      %61 = sbr.rel (0) target = $region25
    $region24: #{tpu_custom_call.1} parent=1 // pred_region
      _
    $region25: #{tpu_custom_call.1} parent=1 // pred_fallthru
      _
    // Predicated region
    $region26: #{tpu_custom_call.1} parent=1 // pred_check
      _
    $region27: #{tpu_custom_call.1} parent=1 // pred_check_branch
      %63 = sbr.rel (0) target = $region29
    $region28: #{tpu_custom_call.1} parent=1 // pred_region
      _
    $region29: #{tpu_custom_call.1} parent=1 // pred_fallthru
      _
    // Predicated region
    $region30: #{tpu_custom_call.1} parent=1 // pred_check
      _
    $region31: #{tpu_custom_call.1} parent=1 // pred_check_branch
      %65 = sbr.rel (0) target = $region33
    $region32: #{tpu_custom_call.1} parent=1 // pred_region
      _
    $region33: #{tpu_custom_call.1} parent=1 // pred_fallthru
      _
    // Predicated region
    $region34: #{tpu_custom_call.1} parent=1 // pred_check
      _
    $region35: #{tpu_custom_call.1} parent=1 // pred_check_branch
      %67 = sbr.rel (0) target = $region37
    $region36: #{tpu_custom_call.1} parent=1 // pred_region
      _
    $region37: #{tpu_custom_call.1} parent=1 // pred_fallthru
      _
    // Predicated region
    $region38: #{tpu_custom_call.1} parent=1 // pred_check
      _
    $region39: #{tpu_custom_call.1} parent=1 // pred_check_branch
      %69 = sbr.rel (0) target = $region41
    $region40: #{tpu_custom_call.1} parent=1 // pred_region
      _
    $region41: #{tpu_custom_call.1} parent=1 // pred_fallthru
      _
    // Predicated region
    $region42: #{tpu_custom_call.1} parent=1 // pred_check
      _
    $region43: #{tpu_custom_call.1} parent=1 // pred_check_branch
      %71 = sbr.rel (0) target = $region45
    $region44: #{tpu_custom_call.1} parent=1 // pred_region
      %72 = dma.done [#allocation4], 4096
    $region45: #{tpu_custom_call.1} parent=1 // pred_fallthru
      _
    // Predicated region
    $region46: #{tpu_custom_call.1} parent=1 // pred_check
      _
    $region47: #{tpu_custom_call.1} parent=1 // pred_check_branch
      %74 = sbr.rel (0) target = $region49
    $region48: #{tpu_custom_call.1} parent=1 // pred_region
      %75 = dma.done [#allocation7], 8192
    $region49: #{tpu_custom_call.1} parent=1 // pred_fallthru
      _
    // Predicated region
    $region50: #{tpu_custom_call.1} parent=1 // pred_check
      _
    $region51: #{tpu_custom_call.1} parent=1 // pred_check_branch
      %77 = sbr.rel (0) target = $region53
    $region52: #{tpu_custom_call.1} parent=1 // pred_region
      %78 = dma.done [#allocation7], 4096
    $region53: #{tpu_custom_call.1} parent=1 // pred_fallthru
      _
    %v79 = vld [vmem:[%s0] sm:$0xff]
    %v80 = vld [vmem:[%s0 + $0x8] sm:$0xff]
    %v81 = vld [vmem:[%s0 + $0x10] sm:$0xff]
    %v82 = vld [vmem:[%s0 + $0x18] sm:$0xff]
    %v83 = vld [vmem:[%s0 + $0x20] sm:$0xff]
    %v84 = vld [vmem:[%s0 + $0x28] sm:$0xff]
    %v85 = vld [vmem:[%s0 + $0x30] sm:$0xff]
    %v86 = vld [vmem:[%s0 + $0x38] sm:$0xff]
    %v87 = vld [vmem:[%s0 + $0x40] sm:$0xff]
    %v88 = vld [vmem:[%s0 + $0x48] sm:$0xff]
    %v89 = vld [vmem:[%s0 + $0x50] sm:$0xff]
    %v90 = vld [vmem:[%s0 + $0x58] sm:$0xff]
    %v91 = vld [vmem:[%s0 + $0x60] sm:$0xff]
    %v92 = vld [vmem:[%s0 + $0x68] sm:$0xff]
    %v93 = vld [vmem:[%s0 + $0x70] sm:$0xff]
    %v94 = vld [vmem:[%s0 + $0x78] sm:$0xff]
    %v95 = vld [vmem:[#allocation3] sm:$0xff]
    %v96 = vld [vmem:[#allocation3 + $0x8] sm:$0xff]
    %v97 = vld [vmem:[#allocation3 + $0x10] sm:$0xff]
    %v98 = vld [vmem:[#allocation3 + $0x18] sm:$0xff]
    %v99 = vld [vmem:[#allocation3 + $0x20] sm:$0xff]
    %v100 = vld [vmem:[#allocation3 + $0x28] sm:$0xff]
    %v101 = vld [vmem:[#allocation3 + $0x30] sm:$0xff]
    %v102 = vld [vmem:[#allocation3 + $0x38] sm:$0xff]
    %v103 = vld [vmem:[#allocation3 + $0x40] sm:$0xff]
    %v104 = vld [vmem:[#allocation3 + $0x48] sm:$0xff]
    %v105 = vld [vmem:[#allocation3 + $0x50] sm:$0xff]
    %v106 = vld [vmem:[#allocation3 + $0x58] sm:$0xff]
    %v107 = vld [vmem:[#allocation3 + $0x60] sm:$0xff]
    %v108 = vld [vmem:[#allocation3 + $0x68] sm:$0xff]
    %v109 = vld [vmem:[#allocation3 + $0x70] sm:$0xff]
    %v110 = vld [vmem:[#allocation3 + $0x78] sm:$0xff]
    %v111 = vld [vmem:[#allocation3 + $0x80] sm:$0xff]
    %v112 = vld [vmem:[#allocation3 + $0x88] sm:$0xff]
    %v113 = vld [vmem:[#allocation3 + $0x90] sm:$0xff]
    %v114 = vld [vmem:[#allocation3 + $0x98] sm:$0xff]
    %v115 = vld [vmem:[#allocation3 + $0xa0] sm:$0xff]
    %v116 = vld [vmem:[#allocation3 + $0xa8] sm:$0xff]
    %v117 = vld [vmem:[#allocation3 + $0xb0] sm:$0xff]
    %v118 = vld [vmem:[#allocation3 + $0xb8] sm:$0xff]
    %v119 = vld [vmem:[#allocation3 + $0xc0] sm:$0xff]
    %v120 = vld [vmem:[#allocation3 + $0xc8] sm:$0xff]
    %v121 = vld [vmem:[#allocation3 + $0xd0] sm:$0xff]
    %v122 = vld [vmem:[#allocation3 + $0xd8] sm:$0xff]
    %v123 = vld [vmem:[#allocation3 + $0xe0] sm:$0xff]
    %v124 = vld [vmem:[#allocation3 + $0xe8] sm:$0xff]
    %v125 = vld [vmem:[#allocation3 + $0xf0] sm:$0xff]
    %v126 = vld [vmem:[#allocation3 + $0xf8] sm:$0xff]
    %127 = vmatprep.subr.mxu0 %v96
    %128 = vmatpush1.msra.mxu0 %v95
    %129 = vmatprep.subr.mxu0 %v98
    %130 = vmatpush1.msra.mxu0 %v97
    %131 = vmatprep.subr.mxu0 %v100
    %132 = vmatpush1.msra.mxu0 %v99
    %133 = vmatprep.subr.mxu0 %v102
    %134 = vmatpush1.msra.mxu0 %v101
    %135 = vmatprep.subr.mxu0 %v104
    %136 = vmatpush1.msra.mxu0 %v103
    %137 = vmatprep.subr.mxu0 %v106
    %138 = vmatpush1.msra.mxu0 %v105
    %139 = vmatprep.subr.mxu0 %v108
    %140 = vmatpush1.msra.mxu0 %v107
    %141 = vmatprep.subr.mxu0 %v110
    %142 = vmatpush1.msra.mxu0 %v109
    %143 = vmatprep.subr.mxu0 %v112
    %144 = vmatpush1.msra.mxu0 %v111
    %145 = vmatprep.subr.mxu0 %v114
    %146 = vmatpush1.msra.mxu0 %v113
    %147 = vmatprep.subr.mxu0 %v116
    %148 = vmatpush1.msra.mxu0 %v115
    %149 = vmatprep.subr.mxu0 %v118
    %150 = vmatpush1.msra.mxu0 %v117
    %151 = vmatprep.subr.mxu0 %v120
    %152 = vmatpush1.msra.mxu0 %v119
    %153 = vmatprep.subr.mxu0 %v122
    %154 = vmatpush1.msra.mxu0 %v121
    %155 = vmatprep.subr.mxu0 %v124
    %156 = vmatpush1.msra.mxu0 %v123
    %157 = vmatprep.subr.mxu0 %v126
    %158 = vmatpush1.msra.mxu0 %v125
    %159 = vmatprep.subr.mxu0 0.0
    %160 = vmatpush1.msra.mxu0 0.0
    %161 = vmatprep.subr.mxu0 0.0
    %162 = vmatpush1.msra.mxu0 0.0
    %163 = vmatprep.subr.mxu0 0.0
    %164 = vmatpush1.msra.mxu0 0.0
    %165 = vmatprep.subr.mxu0 0.0
    %166 = vmatpush1.msra.mxu0 0.0
    %167 = vmatprep.subr.mxu0 0.0
    %168 = vmatpush1.msra.mxu0 0.0
    %169 = vmatprep.subr.mxu0 0.0
    %170 = vmatpush1.msra.mxu0 0.0
    %171 = vmatprep.subr.mxu0 0.0
    %172 = vmatpush1.msra.mxu0 0.0
    %173 = vmatprep.subr.mxu0 0.0
    %174 = vmatpush1.msra.mxu0 0.0
    %175 = vmatprep.subr.mxu0 0.0
    %176 = vmatpush1.msra.mxu0 0.0
    %177 = vmatprep.subr.mxu0 0.0
    %178 = vmatpush1.msra.mxu0 0.0
    %179 = vmatprep.subr.mxu0 0.0
    %180 = vmatpush1.msra.mxu0 0.0
    %181 = vmatprep.subr.mxu0 0.0
    %182 = vmatpush1.msra.mxu0 0.0
    %183 = vmatprep.subr.mxu0 0.0
    %184 = vmatpush1.msra.mxu0 0.0
    %185 = vmatprep.subr.mxu0 0.0
    %186 = vmatpush1.msra.mxu0 0.0
    %187 = vmatprep.subr.mxu0 0.0
    %188 = vmatpush1.msra.mxu0 0.0
    %189 = vmatprep.subr.mxu0 0.0
    %190 = vmatpush1.msra.mxu0 0.0
    %191 = vmatprep.mubr.f32.mxu0 0.0
    %192 = vmatmul.mubr.f32.gmra.mrb[0].mxu0 %v79
    %v193 = vpop.f32.mrb[0].mxu0
    %v194 = vadd.f32 0.0, %v193
    %v195 = vpop.f32.mrb[0].mxu0
    %v196 = vadd.f32 0.0, %v195
    %197 = vmatprep.mubr.f32.mxu0 0.0
    %198 = vmatmul.mubr.f32.gmra.mrb[0].mxu0 %v80
    %v199 = vpop.f32.mrb[0].mxu0
    %v200 = vadd.f32 0.0, %v199
    %v201 = vpop.f32.mrb[0].mxu0
    %v202 = vadd.f32 0.0, %v201
    %203 = vmatprep.mubr.f32.mxu0 0.0
    %204 = vmatmul.mubr.f32.gmra.mrb[0].mxu0 %v81
    %v205 = vpop.f32.mrb[0].mxu0
    %v206 = vadd.f32 0.0, %v205
    %v207 = vpop.f32.mrb[0].mxu0
    %v208 = vadd.f32 0.0, %v207
    %209 = vmatprep.mubr.f32.mxu0 0.0
    %210 = vmatmul.mubr.f32.gmra.mrb[0].mxu0 %v82
    %v211 = vpop.f32.mrb[0].mxu0
    %v212 = vadd.f32 0.0, %v211
    %v213 = vpop.f32.mrb[0].mxu0
    %v214 = vadd.f32 0.0, %v213
    %215 = vmatprep.mubr.f32.mxu0 0.0
    %216 = vmatmul.mubr.f32.gmra.mrb[0].mxu0 %v83
    %v217 = vpop.f32.mrb[0].mxu0
    %v218 = vadd.f32 0.0, %v217
    %v219 = vpop.f32.mrb[0].mxu0
    %v220 = vadd.f32 0.0, %v219
    %221 = vmatprep.mubr.f32.mxu0 0.0
    %222 = vmatmul.mubr.f32.gmra.mrb[0].mxu0 %v84
    %v223 = vpop.f32.mrb[0].mxu0
    %v224 = vadd.f32 0.0, %v223
    %v225 = vpop.f32.mrb[0].mxu0
    %v226 = vadd.f32 0.0, %v225
    %227 = vmatprep.mubr.f32.mxu0 0.0
    %228 = vmatmul.mubr.f32.gmra.mrb[0].mxu0 %v85
    %v229 = vpop.f32.mrb[0].mxu0
    %v230 = vadd.f32 0.0, %v229
    %v231 = vpop.f32.mrb[0].mxu0
    %v232 = vadd.f32 0.0, %v231
    %233 = vmatprep.mubr.f32.mxu0 0.0
    %234 = vmatmul.mubr.f32.gmra.mrb[0].mxu0 %v86
    %v235 = vpop.f32.mrb[0].mxu0
    %v236 = vadd.f32 0.0, %v235
    %v237 = vpop.f32.mrb[0].mxu0
    %v238 = vadd.f32 0.0, %v237
    %239 = vmatprep.mubr.f32.mxu0 0.0
    %240 = vmatmul.mubr.f32.gmra.mrb[0].mxu0 %v87
    %v241 = vpop.f32.mrb[0].mxu0
    %v242 = vadd.f32 0.0, %v241
    %v243 = vpop.f32.mrb[0].mxu0
    %v244 = vadd.f32 0.0, %v243
    %245 = vmatprep.mubr.f32.mxu0 0.0
    %246 = vmatmul.mubr.f32.gmra.mrb[0].mxu0 %v88
    %v247 = vpop.f32.mrb[0].mxu0
    %v248 = vadd.f32 0.0, %v247
    %v249 = vpop.f32.mrb[0].mxu0
    %v250 = vadd.f32 0.0, %v249
    %251 = vmatprep.mubr.f32.mxu0 0.0
    %252 = vmatmul.mubr.f32.gmra.mrb[0].mxu0 %v89
    %v253 = vpop.f32.mrb[0].mxu0
    %v254 = vadd.f32 0.0, %v253
    %v255 = vpop.f32.mrb[0].mxu0
    %v256 = vadd.f32 0.0, %v255
    %257 = vmatprep.mubr.f32.mxu0 0.0
    %258 = vmatmul.mubr.f32.gmra.mrb[0].mxu0 %v90
    %v259 = vpop.f32.mrb[0].mxu0
    %v260 = vadd.f32 0.0, %v259
    %v261 = vpop.f32.mrb[0].mxu0
    %v262 = vadd.f32 0.0, %v261
    %263 = vmatprep.mubr.f32.mxu0 0.0
    %264 = vmatmul.mubr.f32.gmra.mrb[0].mxu0 %v91
    %v265 = vpop.f32.mrb[0].mxu0
    %v266 = vadd.f32 0.0, %v265
    %v267 = vpop.f32.mrb[0].mxu0
    %v268 = vadd.f32 0.0, %v267
    %269 = vmatprep.mubr.f32.mxu0 0.0
    %270 = vmatmul.mubr.f32.gmra.mrb[0].mxu0 %v92
    %v271 = vpop.f32.mrb[0].mxu0
    %v272 = vadd.f32 0.0, %v271
    %v273 = vpop.f32.mrb[0].mxu0
    %v274 = vadd.f32 0.0, %v273
    %275 = vmatprep.mubr.f32.mxu0 0.0
    %276 = vmatmul.mubr.f32.gmra.mrb[0].mxu0 %v93
    %v277 = vpop.f32.mrb[0].mxu0
    %v278 = vadd.f32 0.0, %v277
    %v279 = vpop.f32.mrb[0].mxu0
    %v280 = vadd.f32 0.0, %v279
    %281 = vmatprep.mubr.f32.mxu0 0.0
    %282 = vmatmul.mubr.f32.gmra.mrb[0].mxu0 %v94
    %v283 = vpop.f32.mrb[0].mxu0
    %v284 = vadd.f32 0.0, %v283
    %v285 = vpop.f32.mrb[0].mxu0
    %v286 = vadd.f32 0.0, %v285
    %287 = vdwg.mxu0
    %v288 = vld [vmem:[#allocation6] sm:$0xff]
    %v289 = vld [vmem:[#allocation6 + $0x8] sm:$0xff]
    %v290 = vld [vmem:[#allocation6 + $0x10] sm:$0xff]
    %v291 = vld [vmem:[#allocation6 + $0x18] sm:$0xff]
    %v292 = vld [vmem:[#allocation6 + $0x20] sm:$0xff]
    %v293 = vld [vmem:[#allocation6 + $0x28] sm:$0xff]
    %v294 = vld [vmem:[#allocation6 + $0x30] sm:$0xff]
    %v295 = vld [vmem:[#allocation6 + $0x38] sm:$0xff]
    %v296 = vld [vmem:[#allocation6 + $0x40] sm:$0xff]
    %v297 = vld [vmem:[#allocation6 + $0x48] sm:$0xff]
    %v298 = vld [vmem:[#allocation6 + $0x50] sm:$0xff]
    %v299 = vld [vmem:[#allocation6 + $0x58] sm:$0xff]
    %v300 = vld [vmem:[#allocation6 + $0x60] sm:$0xff]
    %v301 = vld [vmem:[#allocation6 + $0x68] sm:$0xff]
    %v302 = vld [vmem:[#allocation6 + $0x70] sm:$0xff]
    %v303 = vld [vmem:[#allocation6 + $0x78] sm:$0xff]
    %v304 = vld [vmem:[#allocation6 + $0x80] sm:$0xff]
    %v305 = vld [vmem:[#allocation6 + $0x88] sm:$0xff]
    %v306 = vld [vmem:[#allocation6 + $0x90] sm:$0xff]
    %v307 = vld [vmem:[#allocation6 + $0x98] sm:$0xff]
    %v308 = vld [vmem:[#allocation6 + $0xa0] sm:$0xff]
    %v309 = vld [vmem:[#allocation6 + $0xa8] sm:$0xff]
    %v310 = vld [vmem:[#allocation6 + $0xb0] sm:$0xff]
    %v311 = vld [vmem:[#allocation6 + $0xb8] sm:$0xff]
    %v312 = vld [vmem:[#allocation6 + $0xc0] sm:$0xff]
    %v313 = vld [vmem:[#allocation6 + $0xc8] sm:$0xff]
    %v314 = vld [vmem:[#allocation6 + $0xd0] sm:$0xff]
    %v315 = vld [vmem:[#allocation6 + $0xd8] sm:$0xff]
    %v316 = vld [vmem:[#allocation6 + $0xe0] sm:$0xff]
    %v317 = vld [vmem:[#allocation6 + $0xe8] sm:$0xff]
    %v318 = vld [vmem:[#allocation6 + $0xf0] sm:$0xff]
    %v319 = vld [vmem:[#allocation6 + $0xf8] sm:$0xff]
    %v320 = vld [vmem:[#allocation6 + $0x100] sm:$0xff]
    %v321 = vld [vmem:[#allocation6 + $0x108] sm:$0xff]
    %v322 = vld [vmem:[#allocation6 + $0x110] sm:$0xff]
    %v323 = vld [vmem:[#allocation6 + $0x118] sm:$0xff]
    %v324 = vld [vmem:[#allocation6 + $0x120] sm:$0xff]
    %v325 = vld [vmem:[#allocation6 + $0x128] sm:$0xff]
    %v326 = vld [vmem:[#allocation6 + $0x130] sm:$0xff]
    %v327 = vld [vmem:[#allocation6 + $0x138] sm:$0xff]
    %v328 = vld [vmem:[#allocation6 + $0x140] sm:$0xff]
    %v329 = vld [vmem:[#allocation6 + $0x148] sm:$0xff]
    %v330 = vld [vmem:[#allocation6 + $0x150] sm:$0xff]
    %v331 = vld [vmem:[#allocation6 + $0x158] sm:$0xff]
    %v332 = vld [vmem:[#allocation6 + $0x160] sm:$0xff]
    %v333 = vld [vmem:[#allocation6 + $0x168] sm:$0xff]
    %v334 = vld [vmem:[#allocation6 + $0x170] sm:$0xff]
    %v335 = vld [vmem:[#allocation6 + $0x178] sm:$0xff]
    %v336 = vld [vmem:[#allocation6 + $0x180] sm:$0xff]
    %v337 = vld [vmem:[#allocation6 + $0x188] sm:$0xff]
    %v338 = vld [vmem:[#allocation6 + $0x190] sm:$0xff]
    %v339 = vld [vmem:[#allocation6 + $0x198] sm:$0xff]
    %v340 = vld [vmem:[#allocation6 + $0x1a0] sm:$0xff]
    %v341 = vld [vmem:[#allocation6 + $0x1a8] sm:$0xff]
    %v342 = vld [vmem:[#allocation6 + $0x1b0] sm:$0xff]
    %v343 = vld [vmem:[#allocation6 + $0x1b8] sm:$0xff]
    %v344 = vld [vmem:[#allocation6 + $0x1c0] sm:$0xff]
    %v345 = vld [vmem:[#allocation6 + $0x1c8] sm:$0xff]
    %v346 = vld [vmem:[#allocation6 + $0x1d0] sm:$0xff]
    %v347 = vld [vmem:[#allocation6 + $0x1d8] sm:$0xff]
    %v348 = vld [vmem:[#allocation6 + $0x1e0] sm:$0xff]
    %v349 = vld [vmem:[#allocation6 + $0x1e8] sm:$0xff]
    %v350 = vld [vmem:[#allocation6 + $0x1f0] sm:$0xff]
    %v351 = vld [vmem:[#allocation6 + $0x1f8] sm:$0xff]
    %v352 = vld [vmem:[%s3] sm:$0x3]
    %v354 = vlaneseq
    %v355 = vshrl.u32 %v354, 7
    %v356 = vsub.s32 0, %v355
    %v357 = vrot.slane %v352, %v356
    %v358 = vlaneseq
    %v359 = vshrl.u32 %v358, 7
    %v360 = vsub.s32 1, %v359
    %v361 = vrot.slane %v352, %v360
    %364 = vmatprep.subr.mxu0 %v289
    %365 = vmatpush1.msra.mxu0 %v288
    %366 = vmatprep.subr.mxu0 %v291
    %367 = vmatpush1.msra.mxu0 %v290
    %368 = vmatprep.subr.mxu0 %v293
    %369 = vmatpush1.msra.mxu0 %v292
    %370 = vmatprep.subr.mxu0 %v295
    %371 = vmatpush1.msra.mxu0 %v294
    %372 = vmatprep.subr.mxu0 %v297
    %373 = vmatpush1.msra.mxu0 %v296
    %374 = vmatprep.subr.mxu0 %v299
    %375 = vmatpush1.msra.mxu0 %v298
    %376 = vmatprep.subr.mxu0 %v301
    %377 = vmatpush1.msra.mxu0 %v300
    %378 = vmatprep.subr.mxu0 %v303
    %379 = vmatpush1.msra.mxu0 %v302
    %380 = vmatprep.subr.mxu0 %v305
    %381 = vmatpush1.msra.mxu0 %v304
    %382 = vmatprep.subr.mxu0 %v307
    %383 = vmatpush1.msra.mxu0 %v306
    %384 = vmatprep.subr.mxu0 %v309
    %385 = vmatpush1.msra.mxu0 %v308
    %386 = vmatprep.subr.mxu0 %v311
    %387 = vmatpush1.msra.mxu0 %v310
    %388 = vmatprep.subr.mxu0 %v313
    %389 = vmatpush1.msra.mxu0 %v312
    %390 = vmatprep.subr.mxu0 %v315
    %391 = vmatpush1.msra.mxu0 %v314
    %392 = vmatprep.subr.mxu0 %v317
    %393 = vmatpush1.msra.mxu0 %v316
    %394 = vmatprep.subr.mxu0 %v319
    %395 = vmatpush1.msra.mxu0 %v318
    %396 = vmatprep.subr.mxu0 %v321
    %397 = vmatpush1.msra.mxu0 %v320
    %398 = vmatprep.subr.mxu0 %v323
    %399 = vmatpush1.msra.mxu0 %v322
    %400 = vmatprep.subr.mxu0 %v325
    %401 = vmatpush1.msra.mxu0 %v324
    %402 = vmatprep.subr.mxu0 %v327
    %403 = vmatpush1.msra.mxu0 %v326
    %404 = vmatprep.subr.mxu0 %v329
    %405 = vmatpush1.msra.mxu0 %v328
    %406 = vmatprep.subr.mxu0 %v331
    %407 = vmatpush1.msra.mxu0 %v330
    %408 = vmatprep.subr.mxu0 %v333
    %409 = vmatpush1.msra.mxu0 %v332
    %410 = vmatprep.subr.mxu0 %v335
    %411 = vmatpush1.msra.mxu0 %v334
    %412 = vmatprep.subr.mxu0 %v337
    %413 = vmatpush1.msra.mxu0 %v336
    %414 = vmatprep.subr.mxu0 %v339
    %415 = vmatpush1.msra.mxu0 %v338
    %416 = vmatprep.subr.mxu0 %v341
    %417 = vmatpush1.msra.mxu0 %v340
    %418 = vmatprep.subr.mxu0 %v343
    %419 = vmatpush1.msra.mxu0 %v342
    %420 = vmatprep.subr.mxu0 %v345
    %421 = vmatpush1.msra.mxu0 %v344
    %422 = vmatprep.subr.mxu0 %v347
    %423 = vmatpush1.msra.mxu0 %v346
    %424 = vmatprep.subr.mxu0 %v349
    %425 = vmatpush1.msra.mxu0 %v348
    %426 = vmatprep.subr.mxu0 %v351
    %427 = vmatpush1.msra.mxu0 %v350
    %428 = vmatprep.mubr.f32.mxu0 %v196
    %429 = vmatmul.mubr.f32.gmra.mrb[0].mxu0 %v194
    %v430 = vpop.f32.mrb[0].mxu0
    %v431 = vadd.f32 %v357, %v430
    %v432 = vpop.f32.mrb[0].mxu0
    %v433 = vadd.f32 %v361, %v432
    %434 = vmatprep.mubr.f32.mxu0 %v202
    %435 = vmatmul.mubr.f32.gmra.mrb[0].mxu0 %v200
    %v436 = vpop.f32.mrb[0].mxu0
    %v437 = vadd.f32 %v357, %v436
    %v438 = vpop.f32.mrb[0].mxu0
    %v439 = vadd.f32 %v361, %v438
    %440 = vmatprep.mubr.f32.mxu0 %v208
    %441 = vmatmul.mubr.f32.gmra.mrb[0].mxu0 %v206
    %v442 = vpop.f32.mrb[0].mxu0
    %v443 = vadd.f32 %v357, %v442
    %v444 = vpop.f32.mrb[0].mxu0
    %v445 = vadd.f32 %v361, %v444
    %446 = vmatprep.mubr.f32.mxu0 %v214
    %447 = vmatmul.mubr.f32.gmra.mrb[0].mxu0 %v212
    %v448 = vpop.f32.mrb[0].mxu0
    %v449 = vadd.f32 %v357, %v448
    %v450 = vpop.f32.mrb[0].mxu0
    %v451 = vadd.f32 %v361, %v450
    %452 = vmatprep.mubr.f32.mxu0 %v220
    %453 = vmatmul.mubr.f32.gmra.mrb[0].mxu0 %v218
    %v454 = vpop.f32.mrb[0].mxu0
    %v455 = vadd.f32 %v357, %v454
    %v456 = vpop.f32.mrb[0].mxu0
    %v457 = vadd.f32 %v361, %v456
    %458 = vmatprep.mubr.f32.mxu0 %v226
    %459 = vmatmul.mubr.f32.gmra.mrb[0].mxu0 %v224
    %v460 = vpop.f32.mrb[0].mxu0
    %v461 = vadd.f32 %v357, %v460
    %v462 = vpop.f32.mrb[0].mxu0
    %v463 = vadd.f32 %v361, %v462
    %464 = vmatprep.mubr.f32.mxu0 %v232
    %465 = vmatmul.mubr.f32.gmra.mrb[0].mxu0 %v230
    %v466 = vpop.f32.mrb[0].mxu0
    %v467 = vadd.f32 %v357, %v466
    %v468 = vpop.f32.mrb[0].mxu0
    %v469 = vadd.f32 %v361, %v468
    %470 = vmatprep.mubr.f32.mxu0 %v238
    %471 = vmatmul.mubr.f32.gmra.mrb[0].mxu0 %v236
    %v472 = vpop.f32.mrb[0].mxu0
    %v473 = vadd.f32 %v357, %v472
    %v474 = vpop.f32.mrb[0].mxu0
    %v475 = vadd.f32 %v361, %v474
    %476 = vmatprep.mubr.f32.mxu0 %v244
    %477 = vmatmul.mubr.f32.gmra.mrb[0].mxu0 %v242
    %v478 = vpop.f32.mrb[0].mxu0
    %v479 = vadd.f32 %v357, %v478
    %v480 = vpop.f32.mrb[0].mxu0
    %v481 = vadd.f32 %v361, %v480
    %482 = vmatprep.mubr.f32.mxu0 %v250
    %483 = vmatmul.mubr.f32.gmra.mrb[0].mxu0 %v248
    %v484 = vpop.f32.mrb[0].mxu0
    %v485 = vadd.f32 %v357, %v484
    %v486 = vpop.f32.mrb[0].mxu0
    %v487 = vadd.f32 %v361, %v486
    %488 = vmatprep.mubr.f32.mxu0 %v256
    %489 = vmatmul.mubr.f32.gmra.mrb[0].mxu0 %v254
    %v490 = vpop.f32.mrb[0].mxu0
    %v491 = vadd.f32 %v357, %v490
    %v492 = vpop.f32.mrb[0].mxu0
    %v493 = vadd.f32 %v361, %v492
    %494 = vmatprep.mubr.f32.mxu0 %v262
    %495 = vmatmul.mubr.f32.gmra.mrb[0].mxu0 %v260
    %v496 = vpop.f32.mrb[0].mxu0
    %v497 = vadd.f32 %v357, %v496
    %v498 = vpop.f32.mrb[0].mxu0
    %v499 = vadd.f32 %v361, %v498
    %500 = vmatprep.mubr.f32.mxu0 %v268
    %501 = vmatmul.mubr.f32.gmra.mrb[0].mxu0 %v266
    %v502 = vpop.f32.mrb[0].mxu0
    %v503 = vadd.f32 %v357, %v502
    %v504 = vpop.f32.mrb[0].mxu0
    %v505 = vadd.f32 %v361, %v504
    %506 = vmatprep.mubr.f32.mxu0 %v274
    %507 = vmatmul.mubr.f32.gmra.mrb[0].mxu0 %v272
    %v508 = vpop.f32.mrb[0].mxu0
    %v509 = vadd.f32 %v357, %v508
    %v510 = vpop.f32.mrb[0].mxu0
    %v511 = vadd.f32 %v361, %v510
    %512 = vmatprep.mubr.f32.mxu0 %v280
    %513 = vmatmul.mubr.f32.gmra.mrb[0].mxu0 %v278
    %v514 = vpop.f32.mrb[0].mxu0
    %v515 = vadd.f32 %v357, %v514
    %v516 = vpop.f32.mrb[0].mxu0
    %v517 = vadd.f32 %v361, %v516
    %518 = vmatprep.mubr.f32.mxu0 %v286
    %519 = vmatmul.mubr.f32.gmra.mrb[0].mxu0 %v284
    %v520 = vpop.f32.mrb[0].mxu0
    %v521 = vadd.f32 %v357, %v520
    %v522 = vpop.f32.mrb[0].mxu0
    %v523 = vadd.f32 %v361, %v522
    %524 = vdwg.mxu0
    %vm525 = vcmp.ge.f32.partialorder %v431, 0.0
    %vm526 = vcmp.ge.f32.partialorder %v433, 0.0
    %vm527 = vcmp.ge.f32.partialorder %v437, 0.0
    %vm528 = vcmp.ge.f32.partialorder %v439, 0.0
    %vm529 = vcmp.ge.f32.partialorder %v443, 0.0
    %vm530 = vcmp.ge.f32.partialorder %v445, 0.0
    %vm531 = vcmp.ge.f32.partialorder %v449, 0.0
    %vm532 = vcmp.ge.f32.partialorder %v451, 0.0
    %vm533 = vcmp.ge.f32.partialorder %v455, 0.0
    %vm534 = vcmp.ge.f32.partialorder %v457, 0.0
    %vm535 = vcmp.ge.f32.partialorder %v461, 0.0
    %vm536 = vcmp.ge.f32.partialorder %v463, 0.0
    %vm537 = vcmp.ge.f32.partialorder %v467, 0.0
    %vm538 = vcmp.ge.f32.partialorder %v469, 0.0
    %vm539 = vcmp.ge.f32.partialorder %v473, 0.0
    %vm540 = vcmp.ge.f32.partialorder %v475, 0.0
    %vm541 = vcmp.ge.f32.partialorder %v479, 0.0
    %vm542 = vcmp.ge.f32.partialorder %v481, 0.0
    %vm543 = vcmp.ge.f32.partialorder %v485, 0.0
    %vm544 = vcmp.ge.f32.partialorder %v487, 0.0
    %vm545 = vcmp.ge.f32.partialorder %v491, 0.0
    %vm546 = vcmp.ge.f32.partialorder %v493, 0.0
    %vm547 = vcmp.ge.f32.partialorder %v497, 0.0
    %vm548 = vcmp.ge.f32.partialorder %v499, 0.0
    %vm549 = vcmp.ge.f32.partialorder %v503, 0.0
    %vm550 = vcmp.ge.f32.partialorder %v505, 0.0
    %vm551 = vcmp.ge.f32.partialorder %v509, 0.0
    %vm552 = vcmp.ge.f32.partialorder %v511, 0.0
    %vm553 = vcmp.ge.f32.partialorder %v515, 0.0
    %vm554 = vcmp.ge.f32.partialorder %v517, 0.0
    %vm555 = vcmp.ge.f32.partialorder %v521, 0.0
    %vm556 = vcmp.ge.f32.partialorder %v523, 0.0
    %v557 = vmul.f32 %v431, 0.01
    %v558 = vmul.f32 %v433, 0.01
    %v559 = vmul.f32 %v437, 0.01
    %v560 = vmul.f32 %v439, 0.01
    %v561 = vmul.f32 %v443, 0.01
    %v562 = vmul.f32 %v445, 0.01
    %v563 = vmul.f32 %v449, 0.01
    %v564 = vmul.f32 %v451, 0.01
    %v565 = vmul.f32 %v455, 0.01
    %v566 = vmul.f32 %v457, 0.01
    %v567 = vmul.f32 %v461, 0.01
    %v568 = vmul.f32 %v463, 0.01
    %v569 = vmul.f32 %v467, 0.01
    %v570 = vmul.f32 %v469, 0.01
    %v571 = vmul.f32 %v473, 0.01
    %v572 = vmul.f32 %v475, 0.01
    %v573 = vmul.f32 %v479, 0.01
    %v574 = vmul.f32 %v481, 0.01
    %v575 = vmul.f32 %v485, 0.01
    %v576 = vmul.f32 %v487, 0.01
    %v577 = vmul.f32 %v491, 0.01
    %v578 = vmul.f32 %v493, 0.01
    %v579 = vmul.f32 %v497, 0.01
    %v580 = vmul.f32 %v499, 0.01
    %v581 = vmul.f32 %v503, 0.01
    %v582 = vmul.f32 %v505, 0.01
    %v583 = vmul.f32 %v509, 0.01
    %v584 = vmul.f32 %v511, 0.01
    %v585 = vmul.f32 %v515, 0.01
    %v586 = vmul.f32 %v517, 0.01
    %v587 = vmul.f32 %v521, 0.01
    %v588 = vmul.f32 %v523, 0.01
    %v589 = vsel %vm525, %v431, %v557
    %v590 = vsel %vm526, %v433, %v558
    %v591 = vsel %vm527, %v437, %v559
    %v592 = vsel %vm528, %v439, %v560
    %v593 = vsel %vm529, %v443, %v561
    %v594 = vsel %vm530, %v445, %v562
    %v595 = vsel %vm531, %v449, %v563
    %v596 = vsel %vm532, %v451, %v564
    %v597 = vsel %vm533, %v455, %v565
    %v598 = vsel %vm534, %v457, %v566
    %v599 = vsel %vm535, %v461, %v567
    %v600 = vsel %vm536, %v463, %v568
    %v601 = vsel %vm537, %v467, %v569
    %v602 = vsel %vm538, %v469, %v570
    %v603 = vsel %vm539, %v473, %v571
    %v604 = vsel %vm540, %v475, %v572
    %v605 = vsel %vm541, %v479, %v573
    %v606 = vsel %vm542, %v481, %v574
    %v607 = vsel %vm543, %v485, %v575
    %v608 = vsel %vm544, %v487, %v576
    %v609 = vsel %vm545, %v491, %v577
    %v610 = vsel %vm546, %v493, %v578
    %v611 = vsel %vm547, %v497, %v579
    %v612 = vsel %vm548, %v499, %v580
    %v613 = vsel %vm549, %v503, %v581
    %v614 = vsel %vm550, %v505, %v582
    %v615 = vsel %vm551, %v509, %v583
    %v616 = vsel %vm552, %v511, %v584
    %v617 = vsel %vm553, %v515, %v585
    %v618 = vsel %vm554, %v517, %v586
    %v619 = vsel %vm555, %v521, %v587
    %v620 = vsel %vm556, %v523, %v588
    %v621 = vld [vmem:[#allocation8] sm:$0xff]
    %v622 = vld [vmem:[#allocation8 + $0x8] sm:$0xff]
    %v623 = vld [vmem:[#allocation8 + $0x10] sm:$0xff]
    %v624 = vld [vmem:[#allocation8 + $0x18] sm:$0xff]
    %v625 = vld [vmem:[#allocation8 + $0x20] sm:$0xff]
    %v626 = vld [vmem:[#allocation8 + $0x28] sm:$0xff]
    %v627 = vld [vmem:[#allocation8 + $0x30] sm:$0xff]
    %v628 = vld [vmem:[#allocation8 + $0x38] sm:$0xff]
    %v629 = vld [vmem:[#allocation8 + $0x40] sm:$0xff]
    %v630 = vld [vmem:[#allocation8 + $0x48] sm:$0xff]
    %v631 = vld [vmem:[#allocation8 + $0x50] sm:$0xff]
    %v632 = vld [vmem:[#allocation8 + $0x58] sm:$0xff]
    %v633 = vld [vmem:[#allocation8 + $0x60] sm:$0xff]
    %v634 = vld [vmem:[#allocation8 + $0x68] sm:$0xff]
    %v635 = vld [vmem:[#allocation8 + $0x70] sm:$0xff]
    %v636 = vld [vmem:[#allocation8 + $0x78] sm:$0xff]
    %v637 = vld [vmem:[#allocation8 + $0x80] sm:$0xff]
    %v638 = vld [vmem:[#allocation8 + $0x88] sm:$0xff]
    %v639 = vld [vmem:[#allocation8 + $0x90] sm:$0xff]
    %v640 = vld [vmem:[#allocation8 + $0x98] sm:$0xff]
    %v641 = vld [vmem:[#allocation8 + $0xa0] sm:$0xff]
    %v642 = vld [vmem:[#allocation8 + $0xa8] sm:$0xff]
    %v643 = vld [vmem:[#allocation8 + $0xb0] sm:$0xff]
    %v644 = vld [vmem:[#allocation8 + $0xb8] sm:$0xff]
    %v645 = vld [vmem:[#allocation8 + $0xc0] sm:$0xff]
    %v646 = vld [vmem:[#allocation8 + $0xc8] sm:$0xff]
    %v647 = vld [vmem:[#allocation8 + $0xd0] sm:$0xff]
    %v648 = vld [vmem:[#allocation8 + $0xd8] sm:$0xff]
    %v649 = vld [vmem:[#allocation8 + $0xe0] sm:$0xff]
    %v650 = vld [vmem:[#allocation8 + $0xe8] sm:$0xff]
    %v651 = vld [vmem:[#allocation8 + $0xf0] sm:$0xff]
    %v652 = vld [vmem:[#allocation8 + $0xf8] sm:$0xff]
    %v653 = vld [vmem:[%s5] sm:$0x1]
    %v655 = vlaneseq
    %v656 = vshrl.u32 %v655, 7
    %v657 = vsub.s32 0, %v656
    %v658 = vrot.slane %v653, %v657
    %660 = vmatprep.subr.mxu0 0.0
    %661 = vmatpush1.msra.mxu0 %v621
    %662 = vmatprep.subr.mxu0 0.0
    %663 = vmatpush1.msra.mxu0 %v622
    %664 = vmatprep.subr.mxu0 0.0
    %665 = vmatpush1.msra.mxu0 %v623
    %666 = vmatprep.subr.mxu0 0.0
    %667 = vmatpush1.msra.mxu0 %v624
    %668 = vmatprep.subr.mxu0 0.0
    %669 = vmatpush1.msra.mxu0 %v625
    %670 = vmatprep.subr.mxu0 0.0
    %671 = vmatpush1.msra.mxu0 %v626
    %672 = vmatprep.subr.mxu0 0.0
    %673 = vmatpush1.msra.mxu0 %v627
    %674 = vmatprep.subr.mxu0 0.0
    %675 = vmatpush1.msra.mxu0 %v628
    %676 = vmatprep.subr.mxu0 0.0
    %677 = vmatpush1.msra.mxu0 %v629
    %678 = vmatprep.subr.mxu0 0.0
    %679 = vmatpush1.msra.mxu0 %v630
    %680 = vmatprep.subr.mxu0 0.0
    %681 = vmatpush1.msra.mxu0 %v631
    %682 = vmatprep.subr.mxu0 0.0
    %683 = vmatpush1.msra.mxu0 %v632
    %684 = vmatprep.subr.mxu0 0.0
    %685 = vmatpush1.msra.mxu0 %v633
    %686 = vmatprep.subr.mxu0 0.0
    %687 = vmatpush1.msra.mxu0 %v634
    %688 = vmatprep.subr.mxu0 0.0
    %689 = vmatpush1.msra.mxu0 %v635
    %690 = vmatprep.subr.mxu0 0.0
    %691 = vmatpush1.msra.mxu0 %v636
    %692 = vmatprep.subr.mxu0 0.0
    %693 = vmatpush1.msra.mxu0 %v637
    %694 = vmatprep.subr.mxu0 0.0
    %695 = vmatpush1.msra.mxu0 %v638
    %696 = vmatprep.subr.mxu0 0.0
    %697 = vmatpush1.msra.mxu0 %v639
    %698 = vmatprep.subr.mxu0 0.0
    %699 = vmatpush1.msra.mxu0 %v640
    %700 = vmatprep.subr.mxu0 0.0
    %701 = vmatpush1.msra.mxu0 %v641
    %702 = vmatprep.subr.mxu0 0.0
    %703 = vmatpush1.msra.mxu0 %v642
    %704 = vmatprep.subr.mxu0 0.0
    %705 = vmatpush1.msra.mxu0 %v643
    %706 = vmatprep.subr.mxu0 0.0
    %707 = vmatpush1.msra.mxu0 %v644
    %708 = vmatprep.subr.mxu0 0.0
    %709 = vmatpush1.msra.mxu0 %v645
    %710 = vmatprep.subr.mxu0 0.0
    %711 = vmatpush1.msra.mxu0 %v646
    %712 = vmatprep.subr.mxu0 0.0
    %713 = vmatpush1.msra.mxu0 %v647
    %714 = vmatprep.subr.mxu0 0.0
    %715 = vmatpush1.msra.mxu0 %v648
    %716 = vmatprep.subr.mxu0 0.0
    %717 = vmatpush1.msra.mxu0 %v649
    %718 = vmatprep.subr.mxu0 0.0
    %719 = vmatpush1.msra.mxu0 %v650
    %720 = vmatprep.subr.mxu0 0.0
    %721 = vmatpush1.msra.mxu0 %v651
    %722 = vmatprep.subr.mxu0 0.0
    %723 = vmatpush1.msra.mxu0 %v652
    %724 = vmatprep.mubr.f32.mxu0 %v590
    %725 = vmatmul.mubr.f32.gmra.mrb[0].mxu0 %v589
    %v726 = vpop.f32.mrb[0].mxu0
    %v727 = vadd.f32 %v658, %v726
    %v728 = vpop.f32.mrb[0].mxu0
    %729 = vmatprep.mubr.f32.mxu0 %v592
    %730 = vmatmul.mubr.f32.gmra.mrb[0].mxu0 %v591
    %v731 = vpop.f32.mrb[0].mxu0
    %v732 = vadd.f32 %v658, %v731
    %v733 = vpop.f32.mrb[0].mxu0
    %734 = vmatprep.mubr.f32.mxu0 %v594
    %735 = vmatmul.mubr.f32.gmra.mrb[0].mxu0 %v593
    %v736 = vpop.f32.mrb[0].mxu0
    %v737 = vadd.f32 %v658, %v736
    %v738 = vpop.f32.mrb[0].mxu0
    %739 = vmatprep.mubr.f32.mxu0 %v596
    %740 = vmatmul.mubr.f32.gmra.mrb[0].mxu0 %v595
    %v741 = vpop.f32.mrb[0].mxu0
    %v742 = vadd.f32 %v658, %v741
    %v743 = vpop.f32.mrb[0].mxu0
    %744 = vmatprep.mubr.f32.mxu0 %v598
    %745 = vmatmul.mubr.f32.gmra.mrb[0].mxu0 %v597
    %v746 = vpop.f32.mrb[0].mxu0
    %v747 = vadd.f32 %v658, %v746
    %v748 = vpop.f32.mrb[0].mxu0
    %749 = vmatprep.mubr.f32.mxu0 %v600
    %750 = vmatmul.mubr.f32.gmra.mrb[0].mxu0 %v599
    %v751 = vpop.f32.mrb[0].mxu0
    %v752 = vadd.f32 %v658, %v751
    %v753 = vpop.f32.mrb[0].mxu0
    %754 = vmatprep.mubr.f32.mxu0 %v602
    %755 = vmatmul.mubr.f32.gmra.mrb[0].mxu0 %v601
    %v756 = vpop.f32.mrb[0].mxu0
    %v757 = vadd.f32 %v658, %v756
    %v758 = vpop.f32.mrb[0].mxu0
    %759 = vmatprep.mubr.f32.mxu0 %v604
    %760 = vmatmul.mubr.f32.gmra.mrb[0].mxu0 %v603
    %v761 = vpop.f32.mrb[0].mxu0
    %v762 = vadd.f32 %v658, %v761
    %v763 = vpop.f32.mrb[0].mxu0
    %764 = vmatprep.mubr.f32.mxu0 %v606
    %765 = vmatmul.mubr.f32.gmra.mrb[0].mxu0 %v605
    %v766 = vpop.f32.mrb[0].mxu0
    %v767 = vadd.f32 %v658, %v766
    %v768 = vpop.f32.mrb[0].mxu0
    %769 = vmatprep.mubr.f32.mxu0 %v608
    %770 = vmatmul.mubr.f32.gmra.mrb[0].mxu0 %v607
    %v771 = vpop.f32.mrb[0].mxu0
    %v772 = vadd.f32 %v658, %v771
    %v773 = vpop.f32.mrb[0].mxu0
    %774 = vmatprep.mubr.f32.mxu0 %v610
    %775 = vmatmul.mubr.f32.gmra.mrb[0].mxu0 %v609
    %v776 = vpop.f32.mrb[0].mxu0
    %v777 = vadd.f32 %v658, %v776
    %v778 = vpop.f32.mrb[0].mxu0
    %779 = vmatprep.mubr.f32.mxu0 %v612
    %780 = vmatmul.mubr.f32.gmra.mrb[0].mxu0 %v611
    %v781 = vpop.f32.mrb[0].mxu0
    %v782 = vadd.f32 %v658, %v781
    %v783 = vpop.f32.mrb[0].mxu0
    %784 = vmatprep.mubr.f32.mxu0 %v614
    %785 = vmatmul.mubr.f32.gmra.mrb[0].mxu0 %v613
    %v786 = vpop.f32.mrb[0].mxu0
    %v787 = vadd.f32 %v658, %v786
    %v788 = vpop.f32.mrb[0].mxu0
    %789 = vmatprep.mubr.f32.mxu0 %v616
    %790 = vmatmul.mubr.f32.gmra.mrb[0].mxu0 %v615
    %v791 = vpop.f32.mrb[0].mxu0
    %v792 = vadd.f32 %v658, %v791
    %v793 = vpop.f32.mrb[0].mxu0
    %794 = vmatprep.mubr.f32.mxu0 %v618
    %795 = vmatmul.mubr.f32.gmra.mrb[0].mxu0 %v617
    %v796 = vpop.f32.mrb[0].mxu0
    %v797 = vadd.f32 %v658, %v796
    %v798 = vpop.f32.mrb[0].mxu0
    %799 = vmatprep.mubr.f32.mxu0 %v620
    %800 = vmatmul.mubr.f32.gmra.mrb[0].mxu0 %v619
    %v801 = vpop.f32.mrb[0].mxu0
    %v802 = vadd.f32 %v658, %v801
    %v803 = vpop.f32.mrb[0].mxu0
    %804 = vdwg.mxu0
    %vm805 = vcmp.ge.f32.partialorder %v727, 0.0
    %vm806 = vcmp.ge.f32.partialorder %v732, 0.0
    %vm807 = vcmp.ge.f32.partialorder %v737, 0.0
    %vm808 = vcmp.ge.f32.partialorder %v742, 0.0
    %vm809 = vcmp.ge.f32.partialorder %v747, 0.0
    %vm810 = vcmp.ge.f32.partialorder %v752, 0.0
    %vm811 = vcmp.ge.f32.partialorder %v757, 0.0
    %vm812 = vcmp.ge.f32.partialorder %v762, 0.0
    %vm813 = vcmp.ge.f32.partialorder %v767, 0.0
    %vm814 = vcmp.ge.f32.partialorder %v772, 0.0
    %vm815 = vcmp.ge.f32.partialorder %v777, 0.0
    %vm816 = vcmp.ge.f32.partialorder %v782, 0.0
    %vm817 = vcmp.ge.f32.partialorder %v787, 0.0
    %vm818 = vcmp.ge.f32.partialorder %v792, 0.0
    %vm819 = vcmp.ge.f32.partialorder %v797, 0.0
    %vm820 = vcmp.ge.f32.partialorder %v802, 0.0
    %v821 = vmul.f32 %v727, 0.01
    %v822 = vmul.f32 %v732, 0.01
    %v823 = vmul.f32 %v737, 0.01
    %v824 = vmul.f32 %v742, 0.01
    %v825 = vmul.f32 %v747, 0.01
    %v826 = vmul.f32 %v752, 0.01
    %v827 = vmul.f32 %v757, 0.01
    %v828 = vmul.f32 %v762, 0.01
    %v829 = vmul.f32 %v767, 0.01
    %v830 = vmul.f32 %v772, 0.01
    %v831 = vmul.f32 %v777, 0.01
    %v832 = vmul.f32 %v782, 0.01
    %v833 = vmul.f32 %v787, 0.01
    %v834 = vmul.f32 %v792, 0.01
    %v835 = vmul.f32 %v797, 0.01
    %v836 = vmul.f32 %v802, 0.01
    %v837 = vsel %vm805, %v727, %v821
    %v838 = vsel %vm806, %v732, %v822
    %v839 = vsel %vm807, %v737, %v823
    %v840 = vsel %vm808, %v742, %v824
    %v841 = vsel %vm809, %v747, %v825
    %v842 = vsel %vm810, %v752, %v826
    %v843 = vsel %vm811, %v757, %v827
    %v844 = vsel %vm812, %v762, %v828
    %v845 = vsel %vm813, %v767, %v829
    %v846 = vsel %vm814, %v772, %v830
    %v847 = vsel %vm815, %v777, %v831
    %v848 = vsel %vm816, %v782, %v832
    %v849 = vsel %vm817, %v787, %v833
    %v850 = vsel %vm818, %v792, %v834
    %v851 = vsel %vm819, %v797, %v835
    %v852 = vsel %vm820, %v802, %v836
    %v853 = vld [vmem:[%s6] sm:$0xff]
    %v854 = vld [vmem:[%s6 + $0x8] sm:$0xff]
    %v855 = vld [vmem:[%s6 + $0x10] sm:$0xff]
    %v856 = vld [vmem:[%s6 + $0x18] sm:$0xff]
    %v857 = vld [vmem:[%s6 + $0x20] sm:$0xff]
    %v858 = vld [vmem:[%s6 + $0x28] sm:$0xff]
    %v859 = vld [vmem:[%s6 + $0x30] sm:$0xff]
    %v860 = vld [vmem:[%s6 + $0x38] sm:$0xff]
    %v861 = vld [vmem:[%s6 + $0x40] sm:$0xff]
    %v862 = vld [vmem:[%s6 + $0x48] sm:$0xff]
    %v863 = vld [vmem:[%s6 + $0x50] sm:$0xff]
    %v864 = vld [vmem:[%s6 + $0x58] sm:$0xff]
    %v865 = vld [vmem:[%s6 + $0x60] sm:$0xff]
    %v866 = vld [vmem:[%s6 + $0x68] sm:$0xff]
    %v867 = vld [vmem:[%s6 + $0x70] sm:$0xff]
    %v868 = vld [vmem:[%s6 + $0x78] sm:$0xff]
    %v869 = vld [vmem:[%s7] sm:$0x1]
    %v871 = vlaneseq
    %v872 = vshrl.u32 %v871, 7
    %v873 = vsub.s32 0, %v872
    %v874 = vrot.slane %v869, %v873
    %876 = vmatprep.subr.mxu0 0.0
    %877 = vmatpush1.msra.mxu0 %v853
    %878 = vmatprep.subr.mxu0 0.0
    %879 = vmatpush1.msra.mxu0 %v854
    %880 = vmatprep.subr.mxu0 0.0
    %881 = vmatpush1.msra.mxu0 %v855
    %882 = vmatprep.subr.mxu0 0.0
    %883 = vmatpush1.msra.mxu0 %v856
    %884 = vmatprep.subr.mxu0 0.0
    %885 = vmatpush1.msra.mxu0 %v857
    %886 = vmatprep.subr.mxu0 0.0
    %887 = vmatpush1.msra.mxu0 %v858
    %888 = vmatprep.subr.mxu0 0.0
    %889 = vmatpush1.msra.mxu0 %v859
    %890 = vmatprep.subr.mxu0 0.0
    %891 = vmatpush1.msra.mxu0 %v860
    %892 = vmatprep.subr.mxu0 0.0
    %893 = vmatpush1.msra.mxu0 %v861
    %894 = vmatprep.subr.mxu0 0.0
    %895 = vmatpush1.msra.mxu0 %v862
    %896 = vmatprep.subr.mxu0 0.0
    %897 = vmatpush1.msra.mxu0 %v863
    %898 = vmatprep.subr.mxu0 0.0
    %899 = vmatpush1.msra.mxu0 %v864
    %900 = vmatprep.subr.mxu0 0.0
    %901 = vmatpush1.msra.mxu0 %v865
    %902 = vmatprep.subr.mxu0 0.0
    %903 = vmatpush1.msra.mxu0 %v866
    %904 = vmatprep.subr.mxu0 0.0
    %905 = vmatpush1.msra.mxu0 %v867
    %906 = vmatprep.subr.mxu0 0.0
    %907 = vmatpush1.msra.mxu0 %v868
    %908 = vmatprep.subr.mxu0 0.0
    %909 = vmatpush1.msra.mxu0 0.0
    %910 = vmatprep.subr.mxu0 0.0
    %911 = vmatpush1.msra.mxu0 0.0
    %912 = vmatprep.subr.mxu0 0.0
    %913 = vmatpush1.msra.mxu0 0.0
    %914 = vmatprep.subr.mxu0 0.0
    %915 = vmatpush1.msra.mxu0 0.0
    %916 = vmatprep.subr.mxu0 0.0
    %917 = vmatpush1.msra.mxu0 0.0
    %918 = vmatprep.subr.mxu0 0.0
    %919 = vmatpush1.msra.mxu0 0.0
    %920 = vmatprep.subr.mxu0 0.0
    %921 = vmatpush1.msra.mxu0 0.0
    %922 = vmatprep.subr.mxu0 0.0
    %923 = vmatpush1.msra.mxu0 0.0
    %924 = vmatprep.subr.mxu0 0.0
    %925 = vmatpush1.msra.mxu0 0.0
    %926 = vmatprep.subr.mxu0 0.0
    %927 = vmatpush1.msra.mxu0 0.0
    %928 = vmatprep.subr.mxu0 0.0
    %929 = vmatpush1.msra.mxu0 0.0
    %930 = vmatprep.subr.mxu0 0.0
    %931 = vmatpush1.msra.mxu0 0.0
    %932 = vmatprep.subr.mxu0 0.0
    %933 = vmatpush1.msra.mxu0 0.0
    %934 = vmatprep.subr.mxu0 0.0
    %935 = vmatpush1.msra.mxu0 0.0
    %936 = vmatprep.subr.mxu0 0.0
    %937 = vmatpush1.msra.mxu0 0.0
    %938 = vmatprep.subr.mxu0 0.0
    %939 = vmatpush1.msra.mxu0 0.0
    %940 = vmatprep.mubr.f32.mxu0 0.0
    %941 = vmatmul.mubr.f32.gmra.mrb[0].mxu0 %v837
    %v942 = vpop.f32.mrb[0].mxu0
    %v943 = vadd.f32 %v874, %v942
    %v944 = vpop.f32.mrb[0].mxu0
    %945 = vmatprep.mubr.f32.mxu0 0.0
    %946 = vmatmul.mubr.f32.gmra.mrb[0].mxu0 %v838
    %v947 = vpop.f32.mrb[0].mxu0
    %v948 = vadd.f32 %v874, %v947
    %v949 = vpop.f32.mrb[0].mxu0
    %950 = vmatprep.mubr.f32.mxu0 0.0
    %951 = vmatmul.mubr.f32.gmra.mrb[0].mxu0 %v839
    %v952 = vpop.f32.mrb[0].mxu0
    %v953 = vadd.f32 %v874, %v952
    %v954 = vpop.f32.mrb[0].mxu0
    %955 = vmatprep.mubr.f32.mxu0 0.0
    %956 = vmatmul.mubr.f32.gmra.mrb[0].mxu0 %v840
    %v957 = vpop.f32.mrb[0].mxu0
    %v958 = vadd.f32 %v874, %v957
    %v959 = vpop.f32.mrb[0].mxu0
    %960 = vmatprep.mubr.f32.mxu0 0.0
    %961 = vmatmul.mubr.f32.gmra.mrb[0].mxu0 %v841
    %v962 = vpop.f32.mrb[0].mxu0
    %v963 = vadd.f32 %v874, %v962
    %v964 = vpop.f32.mrb[0].mxu0
    %965 = vmatprep.mubr.f32.mxu0 0.0
    %966 = vmatmul.mubr.f32.gmra.mrb[0].mxu0 %v842
    %v967 = vpop.f32.mrb[0].mxu0
    %v968 = vadd.f32 %v874, %v967
    %v969 = vpop.f32.mrb[0].mxu0
    %970 = vmatprep.mubr.f32.mxu0 0.0
    %971 = vmatmul.mubr.f32.gmra.mrb[0].mxu0 %v843
    %v972 = vpop.f32.mrb[0].mxu0
    %v973 = vadd.f32 %v874, %v972
    %v974 = vpop.f32.mrb[0].mxu0
    %975 = vmatprep.mubr.f32.mxu0 0.0
    %976 = vmatmul.mubr.f32.gmra.mrb[0].mxu0 %v844
    %v977 = vpop.f32.mrb[0].mxu0
    %v978 = vadd.f32 %v874, %v977
    %v979 = vpop.f32.mrb[0].mxu0
    %980 = vmatprep.mubr.f32.mxu0 0.0
    %981 = vmatmul.mubr.f32.gmra.mrb[0].mxu0 %v845
    %v982 = vpop.f32.mrb[0].mxu0
    %v983 = vadd.f32 %v874, %v982
    %v984 = vpop.f32.mrb[0].mxu0
    %985 = vmatprep.mubr.f32.mxu0 0.0
    %986 = vmatmul.mubr.f32.gmra.mrb[0].mxu0 %v846
    %v987 = vpop.f32.mrb[0].mxu0
    %v988 = vadd.f32 %v874, %v987
    %v989 = vpop.f32.mrb[0].mxu0
    %990 = vmatprep.mubr.f32.mxu0 0.0
    %991 = vmatmul.mubr.f32.gmra.mrb[0].mxu0 %v847
    %v992 = vpop.f32.mrb[0].mxu0
    %v993 = vadd.f32 %v874, %v992
    %v994 = vpop.f32.mrb[0].mxu0
    %995 = vmatprep.mubr.f32.mxu0 0.0
    %996 = vmatmul.mubr.f32.gmra.mrb[0].mxu0 %v848
    %v997 = vpop.f32.mrb[0].mxu0
    %v998 = vadd.f32 %v874, %v997
    %v999 = vpop.f32.mrb[0].mxu0
    %1000 = vmatprep.mubr.f32.mxu0 0.0
    %1001 = vmatmul.mubr.f32.gmra.mrb[0].mxu0 %v849
    %v1002 = vpop.f32.mrb[0].mxu0
    %v1003 = vadd.f32 %v874, %v1002
    %v1004 = vpop.f32.mrb[0].mxu0
    %1005 = vmatprep.mubr.f32.mxu0 0.0
    %1006 = vmatmul.mubr.f32.gmra.mrb[0].mxu0 %v850
    %v1007 = vpop.f32.mrb[0].mxu0
    %v1008 = vadd.f32 %v874, %v1007
    %v1009 = vpop.f32.mrb[0].mxu0
    %1010 = vmatprep.mubr.f32.mxu0 0.0
    %1011 = vmatmul.mubr.f32.gmra.mrb[0].mxu0 %v851
    %v1012 = vpop.f32.mrb[0].mxu0
    %v1013 = vadd.f32 %v874, %v1012
    %v1014 = vpop.f32.mrb[0].mxu0
    %1015 = vmatprep.mubr.f32.mxu0 0.0
    %1016 = vmatmul.mubr.f32.gmra.mrb[0].mxu0 %v852
    %v1017 = vpop.f32.mrb[0].mxu0
    %v1018 = vadd.f32 %v874, %v1017
    %v1019 = vpop.f32.mrb[0].mxu0
    %1020 = vdwg.mxu0
    %vm1021 = vcmp.ge.f32.partialorder %v943, 0.0
    %vm1022 = vcmp.ge.f32.partialorder %v948, 0.0
    %vm1023 = vcmp.ge.f32.partialorder %v953, 0.0
    %vm1024 = vcmp.ge.f32.partialorder %v958, 0.0
    %vm1025 = vcmp.ge.f32.partialorder %v963, 0.0
    %vm1026 = vcmp.ge.f32.partialorder %v968, 0.0
    %vm1027 = vcmp.ge.f32.partialorder %v973, 0.0
    %vm1028 = vcmp.ge.f32.partialorder %v978, 0.0
    %vm1029 = vcmp.ge.f32.partialorder %v983, 0.0
    %vm1030 = vcmp.ge.f32.partialorder %v988, 0.0
    %vm1031 = vcmp.ge.f32.partialorder %v993, 0.0
    %vm1032 = vcmp.ge.f32.partialorder %v998, 0.0
    %vm1033 = vcmp.ge.f32.partialorder %v1003, 0.0
    %vm1034 = vcmp.ge.f32.partialorder %v1008, 0.0
    %vm1035 = vcmp.ge.f32.partialorder %v1013, 0.0
    %vm1036 = vcmp.ge.f32.partialorder %v1018, 0.0
    %v1037 = vmul.f32 %v943, 0.01
    %v1038 = vmul.f32 %v948, 0.01
    %v1039 = vmul.f32 %v953, 0.01
    %v1040 = vmul.f32 %v958, 0.01
    %v1041 = vmul.f32 %v963, 0.01
    %v1042 = vmul.f32 %v968, 0.01
    %v1043 = vmul.f32 %v973, 0.01
    %v1044 = vmul.f32 %v978, 0.01
    %v1045 = vmul.f32 %v983, 0.01
    %v1046 = vmul.f32 %v988, 0.01
    %v1047 = vmul.f32 %v993, 0.01
    %v1048 = vmul.f32 %v998, 0.01
    %v1049 = vmul.f32 %v1003, 0.01
    %v1050 = vmul.f32 %v1008, 0.01
    %v1051 = vmul.f32 %v1013, 0.01
    %v1052 = vmul.f32 %v1018, 0.01
    %v1053 = vsel %vm1021, %v943, %v1037
    %v1054 = vsel %vm1022, %v948, %v1038
    %v1055 = vsel %vm1023, %v953, %v1039
    %v1056 = vsel %vm1024, %v958, %v1040
    %v1057 = vsel %vm1025, %v963, %v1041
    %v1058 = vsel %vm1026, %v968, %v1042
    %v1059 = vsel %vm1027, %v973, %v1043
    %v1060 = vsel %vm1028, %v978, %v1044
    %v1061 = vsel %vm1029, %v983, %v1045
    %v1062 = vsel %vm1030, %v988, %v1046
    %v1063 = vsel %vm1031, %v993, %v1047
    %v1064 = vsel %vm1032, %v998, %v1048
    %v1065 = vsel %vm1033, %v1003, %v1049
    %v1066 = vsel %vm1034, %v1008, %v1050
    %v1067 = vsel %vm1035, %v1013, %v1051
    %v1068 = vsel %vm1036, %v1018, %v1052
    %v1069 = vld [vmem:[%s8] sm:$0x1]
    %v1071 = vlaneseq
    %v1072 = vshrl.u32 %v1071, 7
    %v1073 = vsub.s32 0, %v1072
    %v1074 = vrot.slane %v1069, %v1073
    %v1076 = vmul.f32 %v1053, %v1074
    %v1077 = vmul.f32 %v1054, %v1074
    %v1078 = vmul.f32 %v1055, %v1074
    %v1079 = vmul.f32 %v1056, %v1074
    %v1080 = vmul.f32 %v1057, %v1074
    %v1081 = vmul.f32 %v1058, %v1074
    %v1082 = vmul.f32 %v1059, %v1074
    %v1083 = vmul.f32 %v1060, %v1074
    %v1084 = vmul.f32 %v1061, %v1074
    %v1085 = vmul.f32 %v1062, %v1074
    %v1086 = vmul.f32 %v1063, %v1074
    %v1087 = vmul.f32 %v1064, %v1074
    %v1088 = vmul.f32 %v1065, %v1074
    %v1089 = vmul.f32 %v1066, %v1074
    %v1090 = vmul.f32 %v1067, %v1074
    %v1091 = vmul.f32 %v1068, %v1074
    %vm1092 = vcmask 523264
    %v1093 = vsel %vm1092, %v1076, 0.0
    %1094 = vadd.xlane.f32.xlu0 %v1093
    %v1095 = vpop.xlane.xlu0 %1094
    %v1096 = vsel %vm1092, %v1077, 0.0
    %1097 = vadd.xlane.f32.xlu0 %v1096
    %v1098 = vpop.xlane.xlu0 %1097
    %v1099 = vsel %vm1092, %v1078, 0.0
    %1100 = vadd.xlane.f32.xlu0 %v1099
    %v1101 = vpop.xlane.xlu0 %1100
    %v1102 = vsel %vm1092, %v1079, 0.0
    %1103 = vadd.xlane.f32.xlu0 %v1102
    %v1104 = vpop.xlane.xlu0 %1103
    %v1105 = vsel %vm1092, %v1080, 0.0
    %1106 = vadd.xlane.f32.xlu0 %v1105
    %v1107 = vpop.xlane.xlu0 %1106
    %v1108 = vsel %vm1092, %v1081, 0.0
    %1109 = vadd.xlane.f32.xlu0 %v1108
    %v1110 = vpop.xlane.xlu0 %1109
    %v1111 = vsel %vm1092, %v1082, 0.0
    %1112 = vadd.xlane.f32.xlu0 %v1111
    %v1113 = vpop.xlane.xlu0 %1112
    %v1114 = vsel %vm1092, %v1083, 0.0
    %1115 = vadd.xlane.f32.xlu0 %v1114
    %v1116 = vpop.xlane.xlu0 %1115
    %v1117 = vsel %vm1092, %v1084, 0.0
    %1118 = vadd.xlane.f32.xlu0 %v1117
    %v1119 = vpop.xlane.xlu0 %1118
    %v1120 = vsel %vm1092, %v1085, 0.0
    %1121 = vadd.xlane.f32.xlu0 %v1120
    %v1122 = vpop.xlane.xlu0 %1121
    %v1123 = vsel %vm1092, %v1086, 0.0
    %1124 = vadd.xlane.f32.xlu0 %v1123
    %v1125 = vpop.xlane.xlu0 %1124
    %v1126 = vsel %vm1092, %v1087, 0.0
    %1127 = vadd.xlane.f32.xlu0 %v1126
    %v1128 = vpop.xlane.xlu0 %1127
    %v1129 = vsel %vm1092, %v1088, 0.0
    %1130 = vadd.xlane.f32.xlu0 %v1129
    %v1131 = vpop.xlane.xlu0 %1130
    %v1132 = vsel %vm1092, %v1089, 0.0
    %1133 = vadd.xlane.f32.xlu0 %v1132
    %v1134 = vpop.xlane.xlu0 %1133
    %v1135 = vsel %vm1092, %v1090, 0.0
    %1136 = vadd.xlane.f32.xlu0 %v1135
    %v1137 = vpop.xlane.xlu0 %1136
    %v1138 = vsel %vm1092, %v1091, 0.0
    %1139 = vadd.xlane.f32.xlu0 %v1138
    %v1140 = vpop.xlane.xlu0 %1139
    %v1141 = vld [vmem:[#allocation2] sm:$0x1]
    %v1143 = vlaneseq
    %v1144 = vshrl.u32 %v1143, 7
    %v1145 = vsub.s32 0, %v1144
    %v1146 = vrot.slane %v1141, %v1145
    %v1148 = vadd.f32 %v1095, %v1146
    %v1149 = vadd.f32 %v1098, %v1146
    %v1150 = vadd.f32 %v1101, %v1146
    %v1151 = vadd.f32 %v1104, %v1146
    %v1152 = vadd.f32 %v1107, %v1146
    %v1153 = vadd.f32 %v1110, %v1146
    %v1154 = vadd.f32 %v1113, %v1146
    %v1155 = vadd.f32 %v1116, %v1146
    %v1156 = vadd.f32 %v1119, %v1146
    %v1157 = vadd.f32 %v1122, %v1146
    %v1158 = vadd.f32 %v1125, %v1146
    %v1159 = vadd.f32 %v1128, %v1146
    %v1160 = vadd.f32 %v1131, %v1146
    %v1161 = vadd.f32 %v1134, %v1146
    %v1162 = vadd.f32 %v1137, %v1146
    %v1163 = vadd.f32 %v1140, %v1146
    %v1164 = vand.u32 2147483647, %v1148
    %v1165 = vand.u32 2147483647, %v1149
    %v1166 = vand.u32 2147483647, %v1150
    %v1167 = vand.u32 2147483647, %v1151
    %v1168 = vand.u32 2147483647, %v1152
    %v1169 = vand.u32 2147483647, %v1153
    %v1170 = vand.u32 2147483647, %v1154
    %v1171 = vand.u32 2147483647, %v1155
    %v1172 = vand.u32 2147483647, %v1156
    %v1173 = vand.u32 2147483647, %v1157
    %v1174 = vand.u32 2147483647, %v1158
    %v1175 = vand.u32 2147483647, %v1159
    %v1176 = vand.u32 2147483647, %v1160
    %v1177 = vand.u32 2147483647, %v1161
    %v1178 = vand.u32 2147483647, %v1162
    %v1179 = vand.u32 2147483647, %v1163
    %v1180 = vsub.f32 0.0, %v1164
    %v1181 = vsub.f32 0.0, %v1165
    %v1182 = vsub.f32 0.0, %v1166
    %v1183 = vsub.f32 0.0, %v1167
    %v1184 = vsub.f32 0.0, %v1168
    %v1185 = vsub.f32 0.0, %v1169
    %v1186 = vsub.f32 0.0, %v1170
    %v1187 = vsub.f32 0.0, %v1171
    %v1188 = vsub.f32 0.0, %v1172
    %v1189 = vsub.f32 0.0, %v1173
    %v1190 = vsub.f32 0.0, %v1174
    %v1191 = vsub.f32 0.0, %v1175
    %v1192 = vsub.f32 0.0, %v1176
    %v1193 = vsub.f32 0.0, %v1177
    %v1194 = vsub.f32 0.0, %v1178
    %v1195 = vsub.f32 0.0, %v1179
    %v1196 = vmul.f32 %v1180, 1.442695
    %v1197 = vpow.pop %v1196
    %v1198 = vmul.f32 %v1181, 1.442695
    %v1199 = vpow.pop %v1198
    %v1200 = vmul.f32 %v1182, 1.442695
    %v1201 = vpow.pop %v1200
    %v1202 = vmul.f32 %v1183, 1.442695
    %v1203 = vpow.pop %v1202
    %v1204 = vmul.f32 %v1184, 1.442695
    %v1205 = vpow.pop %v1204
    %v1206 = vmul.f32 %v1185, 1.442695
    %v1207 = vpow.pop %v1206
    %v1208 = vmul.f32 %v1186, 1.442695
    %v1209 = vpow.pop %v1208
    %v1210 = vmul.f32 %v1187, 1.442695
    %v1211 = vpow.pop %v1210
    %v1212 = vmul.f32 %v1188, 1.442695
    %v1213 = vpow.pop %v1212
    %v1214 = vmul.f32 %v1189, 1.442695
    %v1215 = vpow.pop %v1214
    %v1216 = vmul.f32 %v1190, 1.442695
    %v1217 = vpow.pop %v1216
    %v1218 = vmul.f32 %v1191, 1.442695
    %v1219 = vpow.pop %v1218
    %v1220 = vmul.f32 %v1192, 1.442695
    %v1221 = vpow.pop %v1220
    %v1222 = vmul.f32 %v1193, 1.442695
    %v1223 = vpow.pop %v1222
    %v1224 = vmul.f32 %v1194, 1.442695
    %v1225 = vpow.pop %v1224
    %v1226 = vmul.f32 %v1195, 1.442695
    %v1227 = vpow.pop %v1226
    %v1228 = vadd.f32 %v1197, 1.0
    %v1229 = vadd.f32 %v1199, 1.0
    %v1230 = vadd.f32 %v1201, 1.0
    %v1231 = vadd.f32 %v1203, 1.0
    %v1232 = vadd.f32 %v1205, 1.0
    %v1233 = vadd.f32 %v1207, 1.0
    %v1234 = vadd.f32 %v1209, 1.0
    %v1235 = vadd.f32 %v1211, 1.0
    %v1236 = vadd.f32 %v1213, 1.0
    %v1237 = vadd.f32 %v1215, 1.0
    %v1238 = vadd.f32 %v1217, 1.0
    %v1239 = vadd.f32 %v1219, 1.0
    %v1240 = vadd.f32 %v1221, 1.0
    %v1241 = vadd.f32 %v1223, 1.0
    %v1242 = vadd.f32 %v1225, 1.0
    %v1243 = vadd.f32 %v1227, 1.0
    %v1244 = vrcp.pop %v1228
    %v1245 = vrcp.pop %v1229
    %v1246 = vrcp.pop %v1230
    %v1247 = vrcp.pop %v1231
    %v1248 = vrcp.pop %v1232
    %v1249 = vrcp.pop %v1233
    %v1250 = vrcp.pop %v1234
    %v1251 = vrcp.pop %v1235
    %v1252 = vrcp.pop %v1236
    %v1253 = vrcp.pop %v1237
    %v1254 = vrcp.pop %v1238
    %v1255 = vrcp.pop %v1239
    %v1256 = vrcp.pop %v1240
    %v1257 = vrcp.pop %v1241
    %v1258 = vrcp.pop %v1242
    %v1259 = vrcp.pop %v1243
    %vm1260 = vcmp.ge.f32.partialorder %v1148, 0.0
    %vm1261 = vcmp.ge.f32.partialorder %v1149, 0.0
    %vm1262 = vcmp.ge.f32.partialorder %v1150, 0.0
    %vm1263 = vcmp.ge.f32.partialorder %v1151, 0.0
    %vm1264 = vcmp.ge.f32.partialorder %v1152, 0.0
    %vm1265 = vcmp.ge.f32.partialorder %v1153, 0.0
    %vm1266 = vcmp.ge.f32.partialorder %v1154, 0.0
    %vm1267 = vcmp.ge.f32.partialorder %v1155, 0.0
    %vm1268 = vcmp.ge.f32.partialorder %v1156, 0.0
    %vm1269 = vcmp.ge.f32.partialorder %v1157, 0.0
    %vm1270 = vcmp.ge.f32.partialorder %v1158, 0.0
    %vm1271 = vcmp.ge.f32.partialorder %v1159, 0.0
    %vm1272 = vcmp.ge.f32.partialorder %v1160, 0.0
    %vm1273 = vcmp.ge.f32.partialorder %v1161, 0.0
    %vm1274 = vcmp.ge.f32.partialorder %v1162, 0.0
    %vm1275 = vcmp.ge.f32.partialorder %v1163, 0.0
    %v1276 = vmul.f32 %v1197, %v1244
    %v1277 = vmul.f32 %v1199, %v1245
    %v1278 = vmul.f32 %v1201, %v1246
    %v1279 = vmul.f32 %v1203, %v1247
    %v1280 = vmul.f32 %v1205, %v1248
    %v1281 = vmul.f32 %v1207, %v1249
    %v1282 = vmul.f32 %v1209, %v1250
    %v1283 = vmul.f32 %v1211, %v1251
    %v1284 = vmul.f32 %v1213, %v1252
    %v1285 = vmul.f32 %v1215, %v1253
    %v1286 = vmul.f32 %v1217, %v1254
    %v1287 = vmul.f32 %v1219, %v1255
    %v1288 = vmul.f32 %v1221, %v1256
    %v1289 = vmul.f32 %v1223, %v1257
    %v1290 = vmul.f32 %v1225, %v1258
    %v1291 = vmul.f32 %v1227, %v1259
    %v1292 = vsel %vm1260, %v1244, %v1276
    %v1293 = vsel %vm1261, %v1245, %v1277
    %v1294 = vsel %vm1262, %v1246, %v1278
    %v1295 = vsel %vm1263, %v1247, %v1279
    %v1296 = vsel %vm1264, %v1248, %v1280
    %v1297 = vsel %vm1265, %v1249, %v1281
    %v1298 = vsel %vm1266, %v1250, %v1282
    %v1299 = vsel %vm1267, %v1251, %v1283
    %v1300 = vsel %vm1268, %v1252, %v1284
    %v1301 = vsel %vm1269, %v1253, %v1285
    %v1302 = vsel %vm1270, %v1254, %v1286
    %v1303 = vsel %vm1271, %v1255, %v1287
    %v1304 = vsel %vm1272, %v1256, %v1288
    %v1305 = vsel %vm1273, %v1257, %v1289
    %v1306 = vsel %vm1274, %v1258, %v1290
    %v1307 = vsel %vm1275, %v1259, %v1291
    %1309 = vset.pattern.permute.xlu0 0
    %1310 = vperm.xlu0 %1309, %v1292
    %v1311 = vpop.permute.xlu0 %1310
    %1314 = vset.pattern.permute.xlu0 0
    %1315 = vperm.xlu0 %1314, %v1293
    %v1316 = vpop.permute.xlu0 %1315
    %1319 = vset.pattern.permute.xlu0 0
    %1320 = vperm.xlu0 %1319, %v1294
    %v1321 = vpop.permute.xlu0 %1320
    %1324 = vset.pattern.permute.xlu0 0
    %1325 = vperm.xlu0 %1324, %v1295
    %v1326 = vpop.permute.xlu0 %1325
    %1329 = vset.pattern.permute.xlu0 0
    %1330 = vperm.xlu0 %1329, %v1296
    %v1331 = vpop.permute.xlu0 %1330
    %1334 = vset.pattern.permute.xlu0 0
    %1335 = vperm.xlu0 %1334, %v1297
    %v1336 = vpop.permute.xlu0 %1335
    %1339 = vset.pattern.permute.xlu0 0
    %1340 = vperm.xlu0 %1339, %v1298
    %v1341 = vpop.permute.xlu0 %1340
    %1344 = vset.pattern.permute.xlu0 0
    %1345 = vperm.xlu0 %1344, %v1299
    %v1346 = vpop.permute.xlu0 %1345
    %1349 = vset.pattern.permute.xlu0 0
    %1350 = vperm.xlu0 %1349, %v1300
    %v1351 = vpop.permute.xlu0 %1350
    %1354 = vset.pattern.permute.xlu0 0
    %1355 = vperm.xlu0 %1354, %v1301
    %v1356 = vpop.permute.xlu0 %1355
    %1359 = vset.pattern.permute.xlu0 0
    %1360 = vperm.xlu0 %1359, %v1302
    %v1361 = vpop.permute.xlu0 %1360
    %1364 = vset.pattern.permute.xlu0 0
    %1365 = vperm.xlu0 %1364, %v1303
    %v1366 = vpop.permute.xlu0 %1365
    %1369 = vset.pattern.permute.xlu0 0
    %1370 = vperm.xlu0 %1369, %v1304
    %v1371 = vpop.permute.xlu0 %1370
    %1374 = vset.pattern.permute.xlu0 0
    %1375 = vperm.xlu0 %1374, %v1305
    %v1376 = vpop.permute.xlu0 %1375
    %1379 = vset.pattern.permute.xlu0 0
    %1380 = vperm.xlu0 %1379, %v1306
    %v1381 = vpop.permute.xlu0 %1380
    %1384 = vset.pattern.permute.xlu0 0
    %1385 = vperm.xlu0 %1384, %v1307
    %v1386 = vpop.permute.xlu0 %1385
    %1388 = vst [vmem:[#allocation9] sm:$0xff] %v1311
    %1389 = vst [vmem:[#allocation9 + $0x8] sm:$0xff] %v1316
    %1390 = vst [vmem:[#allocation9 + $0x10] sm:$0xff] %v1321
    %1391 = vst [vmem:[#allocation9 + $0x18] sm:$0xff] %v1326
    %1392 = vst [vmem:[#allocation9 + $0x20] sm:$0xff] %v1331
    %1393 = vst [vmem:[#allocation9 + $0x28] sm:$0xff] %v1336
    %1394 = vst [vmem:[#allocation9 + $0x30] sm:$0xff] %v1341
    %1395 = vst [vmem:[#allocation9 + $0x38] sm:$0xff] %v1346
    %1396 = vst [vmem:[#allocation9 + $0x40] sm:$0xff] %v1351
    %1397 = vst [vmem:[#allocation9 + $0x48] sm:$0xff] %v1356
    %1398 = vst [vmem:[#allocation9 + $0x50] sm:$0xff] %v1361
    %1399 = vst [vmem:[#allocation9 + $0x58] sm:$0xff] %v1366
    %1400 = vst [vmem:[#allocation9 + $0x60] sm:$0xff] %v1371
    %1401 = vst [vmem:[#allocation9 + $0x68] sm:$0xff] %v1376
    %1402 = vst [vmem:[#allocation9 + $0x70] sm:$0xff] %v1381
    %1403 = vst [vmem:[#allocation9 + $0x78] sm:$0xff] %v1386
    // Predicated region
    $region54: #{tpu_custom_call.1} parent=1 // pred_check
      _
    $region55: #{tpu_custom_call.1} parent=1 // pred_check_branch
      %1405 = sbr.rel (0) target = $region57
    $region56: #{tpu_custom_call.1} parent=1 // pred_region
      %s1407 = ssub.s32 2048, 2048
      %1408 = vsyncadd [#allocation5], %s1407
      %s1409 = sshll.u32 [#allocation9], 4
      %s1410 = int_to_ptr.vmem [resolvable:$true] %s1409
      %1415 = dma.vmem_to_hbm [thread:$0]  %s1410, 2048, %s10, [#allocation5], 128, 128, 8
    $region57: #{tpu_custom_call.1} parent=1 // pred_fallthru
      _
    // Predicated region
    $region58: #{tpu_custom_call.1} parent=1 // pred_check
      _
    $region59: #{tpu_custom_call.1} parent=1 // pred_check_branch
      %1417 = sbr.rel (0) target = $region61
    $region60: #{tpu_custom_call.1} parent=1 // pred_region
      %1418 = dma.done [#allocation5], 2048
    $region61: #{tpu_custom_call.1} parent=1 // pred_fallthru
      _
    %1419 = vsyncpa [#allocation4], 1
    %1420 = vsyncpa [#allocation7], 1
    %1421 = vsyncpa [#allocation5], 1

</llo_original>
